<compile_context>
chip_gen: v7x
topology: tpu7x:2x2x1
jax: 0.10.0
libtpu: 0.0.40
codegen_flags: <defaults>
</compile_context>

<pallas_src>
import functools
import math

import jax
import jax.numpy as jnp
from jax import lax
from jax.experimental import pallas as pl
from jax.experimental.pallas import tpu as pltpu


# ------------------------------------------------------------------ Pallas kernel

def _cait_attention_kernel(x_ref, wq_ref, wkv_ref, mix_pre_ref, mix_post_ref,
                           wout_ref, bout_ref, o_ref, kv_ref, hcat_ref,
                           *, heads, dim_head, block_b, q_tile, n, dim):
    inner = heads * dim_head
    qi = pl.program_id(1)

    # ---- K/V projection: once per batch block (qi == 0), cached in bf16 scratch.
    # x block is resident across the q axis (constant index_map along qi).
    @pl.when(qi == 0)
    def _():
        xf = x_ref[...].reshape(block_b * n, dim)                       # bf16
        kv = jnp.dot(xf, wkv_ref[...], preferred_element_type=jnp.float32)
        kv_ref[...] = kv.reshape(block_b, n, 2 * inner).astype(kv_ref.dtype)

    # ---- Q projection for this query tile, all batch rows flattened (M = Bt*tq).
    if q_tile == n:
        xq = x_ref[...]                                                 # (Bt, n, dim)
    else:
        start = pl.multiple_of(qi * q_tile, 8)
        xq = x_ref[:, pl.ds(start, q_tile), :]                          # (Bt, tq, dim)
    q = jnp.dot(xq.reshape(block_b * q_tile, dim), wq_ref[...],
                preferred_element_type=jnp.float32).astype(jnp.bfloat16)

    # ---- Attention per batch row (heads / Bt are small & static -> unrolled).
    for b in range(block_b):
        kv_b = kv_ref[b]                                                # (n, 2*inner) bf16
        k_b = kv_b[:, :inner]
        v_b = kv_b[:, inner:]
        q_b = q[b * q_tile:(b + 1) * q_tile, :]                         # (tq, inner) bf16

        # Per-head logits (attention scale is folded into mix_pre by the wrapper).
        dots = []
        for h in range(heads):
            qh = q_b[:, h * dim_head:(h + 1) * dim_head]
            kh = k_b[:, h * dim_head:(h + 1) * dim_head]
            dots.append(lax.dot_general(
                qh, kh, (((1,), (1,)), ((), ())),
                preferred_element_type=jnp.float32))                    # (tq, n) f32

        # Talking heads (pre-softmax) + softmax (f32 math; EUP reciprocal).
        attn = []
        for g in range(heads):
            dg = dots[0] * mix_pre_ref[0, g]
            for h in range(1, heads):
                dg = dg + dots[h] * mix_pre_ref[h, g]
            dg = dg - jnp.max(dg, axis=-1, keepdims=True)
            eg = jnp.exp(dg)
            inv = pl.reciprocal(jnp.sum(eg, axis=-1, keepdims=True), approx=True)
            attn.append(eg * inv)                                       # (tq, n) f32

        # Talking heads (post-softmax) + attn @ V; per-head results scattered into
        # a (Bt, tq, inner) scratch so the output projection is ONE K=inner matmul.
        for g in range(heads):
            ag = attn[0] * mix_post_ref[0, g]
            for h in range(1, heads):
                ag = ag + attn[h] * mix_post_ref[h, g]
            vg = v_b[:, g * dim_head:(g + 1) * dim_head]                # (n, dh) bf16
            og = jnp.dot(ag.astype(jnp.bfloat16), vg,
                         preferred_element_type=jnp.float32)            # (tq, dh) f32
            hcat_ref[b, :, g * dim_head:(g + 1) * dim_head] = og.astype(hcat_ref.dtype)

    # ---- Fused output projection (single matmul, K = inner) + bias.
    flat = hcat_ref[...].reshape(block_b * q_tile, inner)               # bf16
    y = jnp.dot(flat, wout_ref[...], preferred_element_type=jnp.float32)
    y = y + bout_ref[...]                                               # (1, dim) f32 broadcast
    o_ref[...] = y.reshape(block_b, q_tile, dim).astype(o_ref.dtype)


# ------------------------------------------------------------------ tiling helpers

def _pick_q_tile(n):
    """Largest query tile <= 256 that divides n and is sublane aligned; else n."""
    if n <= 256:
        return n
    for t in range(256, 7, -8):          # multiples of 8 only
        if n % t == 0:
            return t
    return n


def _pick_block_b(B, n):
    """Batch rows per grid step: fill the MXU M dim (~256 rows) for projections."""
    target = max(1, 256 // max(n, 1))
    best = 1
    for d in range(1, B + 1):
        if B % d == 0 and d <= target:
            best = d
    return best


# ------------------------------------------------------------------ wrapper

def attention_forward(x, params, *, heads, dim_head):
    """x: (B, n, dim) -> (B, n, dim). Matches Attention.forward (is_base=True)."""
    B, n, dim = x.shape
    inner = heads * dim_head
    scale = dim_head ** -0.5

    block_b = _pick_block_b(B, n)
    q_tile = _pick_q_tile(n)
    n_q = n // q_tile

    # bf16 MXU operands; the softmax scale is folded into the tiny mix_pre matrix
    # (linear in the logits -> mathematically identical, and free in SMEM).
    x_bf = x.astype(jnp.bfloat16)
    wq = params["wq"].astype(jnp.bfloat16)
    wkv = params["wkv"].astype(jnp.bfloat16)
    wout = params["wout"].astype(jnp.bfloat16)
    mix_pre_s = (params["mix_pre"] * scale).astype(jnp.float32)
    mix_post = params["mix_post"].astype(jnp.float32)
    bout = params["bout"].reshape(1, dim).astype(jnp.float32)

    # Derive the VMEM budget from actual buffer sizes (double-buffered blocks +
    # scratch + a rough live-intermediate estimate), clamped for v7x's 64 MiB.
    out_isz = jnp.dtype(x.dtype).itemsize
    blk = 2 * (block_b * n * dim * 2 + dim * inner * 2 + dim * 2 * inner * 2
               + inner * dim * 2 + dim * 4 + block_b * q_tile * dim * out_isz)
    scr = block_b * n * 2 * inner * 2 + block_b * q_tile * inner * 2
    live = 4 * (2 * heads * q_tile * n + block_b * q_tile * inner
                + block_b * n * 2 * inner + 2 * block_b * q_tile * dim)
    vmem_limit = max(16 << 20, min(64 << 20, blk + scr + live + (4 << 20)))

    kernel = functools.partial(_cait_attention_kernel, heads=heads,
                               dim_head=dim_head, block_b=block_b,
                               q_tile=q_tile, n=n, dim=dim)

    return pl.pallas_call(
        kernel,
        out_shape=jax.ShapeDtypeStruct((B, n, dim), x.dtype),
        grid_spec=pltpu.PrefetchScalarGridSpec(
            num_scalar_prefetch=0,
            grid=(B // block_b, n_q),
            in_specs=[
                pl.BlockSpec((block_b, n, dim), lambda bi, qi: (bi, 0, 0)),   # x (resident over qi)
                pl.BlockSpec((dim, inner), lambda bi, qi: (0, 0)),            # Wq (bf16)
                pl.BlockSpec((dim, 2 * inner), lambda bi, qi: (0, 0)),        # Wkv (bf16)
                pl.BlockSpec(memory_space=pltpu.MemorySpace.SMEM),            # mix_pre * scale
                pl.BlockSpec(memory_space=pltpu.MemorySpace.SMEM),            # mix_post
                pl.BlockSpec((inner, dim), lambda bi, qi: (0, 0)),            # Wout (bf16)
                pl.BlockSpec((1, dim), lambda bi, qi: (0, 0)),                # bias (f32)
            ],
            out_specs=pl.BlockSpec((block_b, q_tile, dim), lambda bi, qi: (bi, qi, 0)),
            scratch_shapes=[
                pltpu.VMEM((block_b, n, 2 * inner), jnp.bfloat16),            # cached K/V
                pltpu.VMEM((block_b, q_tile, inner), jnp.bfloat16),           # head-concat slab
            ],
        ),
        compiler_params=pltpu.CompilerParams(
            # q axis is "arbitrary": K/V scratch produced at qi==0 is reused.
            dimension_semantics=("parallel", "arbitrary"),
            vmem_limit_bytes=int(vmem_limit),
        ),
    )(x_bf, wq, wkv, mix_pre_s, mix_post, wout, bout)


# ------------------------------------------------------------------ reference + init

def attention_ref(x, params, *, heads, dim_head):
    """Plain-JAX reference mirroring the PyTorch forward (is_base=True)."""
    B, n, dim = x.shape
    inner = heads * dim_head
    scale = dim_head ** -0.5
    q = x @ params["wq"]
    kv = x @ params["wkv"]
    k, v = kv[..., :inner], kv[..., inner:]

    def split(t):
        return t.reshape(B, n, heads, dim_head).transpose(0, 2, 1, 3)

    q, k, v = split(q), split(k), split(v)
    dots = jnp.einsum("bhid,bhjd->bhij", q, k) * scale
    dots = jnp.einsum("bhij,hg->bgij", dots, params["mix_pre"])
    attn = jax.nn.softmax(dots, axis=-1)
    attn = jnp.einsum("bhij,hg->bgij", attn, params["mix_post"])
    out = jnp.einsum("bhij,bhjd->bhid", attn, v)
    out = out.transpose(0, 2, 1, 3).reshape(B, n, inner)
    return out @ params["wout"] + params["bout"].reshape(1, -1)


def init_params(key, dim, heads, dim_head):
    inner = heads * dim_head
    ks = jax.random.split(key, 5)
    return {
        # nn.Linear(dim, inner, bias=False): y = x @ W.T; store W.T directly.
        "wq": jax.random.normal(ks[0], (dim, inner), jnp.float32) * dim ** -0.5,
        "wkv": jax.random.normal(ks[1], (dim, 2 * inner), jnp.float32) * dim ** -0.5,
        "mix_pre": jax.random.normal(ks[2], (heads, heads), jnp.float32),
        "mix_post": jax.random.normal(ks[3], (heads, heads), jnp.float32),
        "wout": jax.random.normal(ks[4], (inner, dim), jnp.float32) * inner ** -0.5,
        "bout": jnp.zeros((dim,), jnp.float32),
    }


if __name__ == "__main__":
    B, n, dim = 2, 8, 32          # batch, num_patches (seq), hidden
    heads, dim_head = 4, 16       # inner_dim = 64

    key = jax.random.PRNGKey(0)
    kx, kp = jax.random.split(key)
    x = jax.random.normal(kx, (B, n, dim), jnp.float32)
    params = init_params(kp, dim, heads, dim_head)

    out = attention_forward(x, params, heads=heads, dim_head=dim_head)
    jax.block_until_ready(out)
    assert out.shape == (B, n, dim), out.shape

    # References: full f32, and one with bf16-rounded operands (what the MXU path
    # sees) but f32 math — the kernel should be close to the latter.
    ref = attention_ref(x, params, heads=heads, dim_head=dim_head)
    rb = lambda t: t.astype(jnp.bfloat16).astype(jnp.float32)
    params_bf = dict(params, wq=rb(params["wq"]), wkv=rb(params["wkv"]),
                     wout=rb(params["wout"]))
    ref_bf = attention_ref(rb(x), params_bf, heads=heads, dim_head=dim_head)

    err_bf = float(jnp.max(jnp.abs(out - ref_bf)))
    err_f32 = float(jnp.max(jnp.abs(out - ref)))
    assert err_bf < 1.5e-1, (err_bf, err_f32)
    assert err_f32 < 3.5e-1, (err_bf, err_f32)

    print("KERNEL_OK")
</pallas_src>

<mosaic_0001>
module attributes {stable_mosaic.version = 11 : i64} {
  func.func @_cait_attention_kernel(%arg0: i32, %arg1: i32, %arg2: memref<2x8x32xbf16, #tpu.memory_space<vmem>>, %arg3: memref<32x64xbf16, #tpu.memory_space<vmem>>, %arg4: memref<32x128xbf16, #tpu.memory_space<vmem>>, %arg5: memref<4x4xf32, #tpu.memory_space<smem>>, %arg6: memref<4x4xf32, #tpu.memory_space<smem>>, %arg7: memref<64x32xbf16, #tpu.memory_space<vmem>>, %arg8: memref<1x32xf32, #tpu.memory_space<vmem>>, %arg9: memref<2x8x32xf32, #tpu.memory_space<vmem>>, %arg10: memref<2x8x128xbf16, #tpu.memory_space<vmem>>, %arg11: memref<2x8x64xbf16, #tpu.memory_space<vmem>>) attributes {dimension_semantics = [#tpu.dimension_semantics<parallel>, #tpu.dimension_semantics<arbitrary>], iteration_bounds = array<i64: 1, 1>, scalar_prefetch = 0 : i64, scratch_operands = 2 : i64, tpu.core_type = #tpu.core_type<tc>, window_params = [{transform_indices = @transform_0, window_bounds = array<i64: 2, 8, 32>}, {pipeline_mode = #tpu.pipeline_mode<synchronous>, transform_indices = @transform_1, window_bounds = array<i64: 32, 64>}, {pipeline_mode = #tpu.pipeline_mode<synchronous>, transform_indices = @transform_2, window_bounds = array<i64: 32, 128>}, {transform_indices = @transform_3, window_bounds = array<i64: 4, 4>}, {transform_indices = @transform_4, window_bounds = array<i64: 4, 4>}, {pipeline_mode = #tpu.pipeline_mode<synchronous>, transform_indices = @transform_5, window_bounds = array<i64: 64, 32>}, {pipeline_mode = #tpu.pipeline_mode<synchronous>, transform_indices = @transform_6, window_bounds = array<i64: 1, 32>}, {transform_indices = @transform_7, window_bounds = array<i64: 2, 8, 32>}]} {
    %c0_i32 = arith.constant 0 : i32
    %0 = arith.cmpi eq, %arg1, %c0_i32 : i32
    %1 = arith.extui %0 : i1 to i32
    %c0_i32_0 = arith.constant 0 : i32
    %2 = arith.cmpi ne, %1, %c0_i32_0 : i32
    scf.if %2 {
      %c0_200 = arith.constant 0 : index
      %c0_201 = arith.constant 0 : index
      %c0_202 = arith.constant 0 : index
      %427 = vector.load %arg2[%c0_200, %c0_201, %c0_202] : memref<2x8x32xbf16, #tpu.memory_space<vmem>>, vector<2x8x32xbf16>
      %428 = vector.shape_cast %427 : vector<2x8x32xbf16> to vector<16x32xbf16>
      %c0_203 = arith.constant 0 : index
      %c0_204 = arith.constant 0 : index
      %429 = vector.load %arg4[%c0_203, %c0_204] : memref<32x128xbf16, #tpu.memory_space<vmem>>, vector<32x128xbf16>
      %cst_205 = arith.constant dense<0.000000e+00> : vector<16x128xf32>
      %430 = tpu.matmul %428, %429, %cst_205 {dimension_numbers = #tpu.dot_dimension_numbers<[1], [0], [0], [1], [0, 0, 1, 1], [], []>} : vector<16x32xbf16>, vector<32x128xbf16>, vector<16x128xf32> -> vector<16x128xf32>
      %431 = vector.shape_cast %430 : vector<16x128xf32> to vector<2x8x128xf32>
      %432 = arith.truncf %431 : vector<2x8x128xf32> to vector<2x8x128xbf16>
      %c0_206 = arith.constant 0 : index
      %c0_207 = arith.constant 0 : index
      %c0_208 = arith.constant 0 : index
      %433 = vector.load %arg10[%c0_206, %c0_207, %c0_208] : memref<2x8x128xbf16, #tpu.memory_space<vmem>>, vector<2x8x128xbf16>
      tpu.vector_store %arg10[%c0_206, %c0_207, %c0_208], %432 {strides = array<i32>} : memref<2x8x128xbf16, #tpu.memory_space<vmem>>, vector<2x8x128xbf16>,
    } else {
    }
    %c0 = arith.constant 0 : index
    %c0_1 = arith.constant 0 : index
    %c0_2 = arith.constant 0 : index
    %3 = vector.load %arg2[%c0, %c0_1, %c0_2] : memref<2x8x32xbf16, #tpu.memory_space<vmem>>, vector<2x8x32xbf16>
    %4 = vector.shape_cast %3 : vector<2x8x32xbf16> to vector<16x32xbf16>
    %c0_3 = arith.constant 0 : index
    %c0_4 = arith.constant 0 : index
    %5 = vector.load %arg3[%c0_3, %c0_4] : memref<32x64xbf16, #tpu.memory_space<vmem>>, vector<32x64xbf16>
    %cst = arith.constant dense<0.000000e+00> : vector<16x64xf32>
    %6 = tpu.matmul %4, %5, %cst {dimension_numbers = #tpu.dot_dimension_numbers<[1], [0], [0], [1], [0, 0, 1, 1], [], []>} : vector<16x32xbf16>, vector<32x64xbf16>, vector<16x64xf32> -> vector<16x64xf32>
    %7 = arith.truncf %6 : vector<16x64xf32> to vector<16x64xbf16>
    %c0_5 = arith.constant 0 : index
    %c0_6 = arith.constant 0 : index
    %c0_7 = arith.constant 0 : index
    %8 = vector.load %arg10[%c0_5, %c0_6, %c0_7] : memref<2x8x128xbf16, #tpu.memory_space<vmem>>, vector<1x8x128xbf16>
    %9 = vector.shape_cast %8 : vector<1x8x128xbf16> to vector<8x128xbf16>
    %10 = vector.extract_strided_slice %9 {offsets = [0, 0], sizes = [8, 64], strides = [1, 1]} : vector<8x128xbf16> to vector<8x64xbf16>
    %11 = vector.extract_strided_slice %9 {offsets = [0, 64], sizes = [8, 64], strides = [1, 1]} : vector<8x128xbf16> to vector<8x64xbf16>
    %12 = vector.extract_strided_slice %7 {offsets = [0, 0], sizes = [8, 64], strides = [1, 1]} : vector<16x64xbf16> to vector<8x64xbf16>
    %13 = vector.extract_strided_slice %12 {offsets = [0, 0], sizes = [8, 16], strides = [1, 1]} : vector<8x64xbf16> to vector<8x16xbf16>
    %14 = vector.extract_strided_slice %10 {offsets = [0, 0], sizes = [8, 16], strides = [1, 1]} : vector<8x64xbf16> to vector<8x16xbf16>
    %cst_8 = arith.constant dense<0.000000e+00> : vector<8x8xf32>
    %15 = tpu.matmul %13, %14, %cst_8 {dimension_numbers = #tpu.dot_dimension_numbers<[1], [1], [0], [0], [0, 0, 1, 0], [], []>} : vector<8x16xbf16>, vector<8x16xbf16>, vector<8x8xf32> -> vector<8x8xf32>
    %16 = vector.extract_strided_slice %12 {offsets = [0, 16], sizes = [8, 16], strides = [1, 1]} : vector<8x64xbf16> to vector<8x16xbf16>
    %17 = vector.extract_strided_slice %10 {offsets = [0, 16], sizes = [8, 16], strides = [1, 1]} : vector<8x64xbf16> to vector<8x16xbf16>
    %cst_9 = arith.constant dense<0.000000e+00> : vector<8x8xf32>
    %18 = tpu.matmul %16, %17, %cst_9 {dimension_numbers = #tpu.dot_dimension_numbers<[1], [1], [0], [0], [0, 0, 1, 0], [], []>} : vector<8x16xbf16>, vector<8x16xbf16>, vector<8x8xf32> -> vector<8x8xf32>
    %19 = vector.extract_strided_slice %12 {offsets = [0, 32], sizes = [8, 16], strides = [1, 1]} : vector<8x64xbf16> to vector<8x16xbf16>
    %20 = vector.extract_strided_slice %10 {offsets = [0, 32], sizes = [8, 16], strides = [1, 1]} : vector<8x64xbf16> to vector<8x16xbf16>
    %cst_10 = arith.constant dense<0.000000e+00> : vector<8x8xf32>
    %21 = tpu.matmul %19, %20, %cst_10 {dimension_numbers = #tpu.dot_dimension_numbers<[1], [1], [0], [0], [0, 0, 1, 0], [], []>} : vector<8x16xbf16>, vector<8x16xbf16>, vector<8x8xf32> -> vector<8x8xf32>
    %22 = vector.extract_strided_slice %12 {offsets = [0, 48], sizes = [8, 16], strides = [1, 1]} : vector<8x64xbf16> to vector<8x16xbf16>
    %23 = vector.extract_strided_slice %10 {offsets = [0, 48], sizes = [8, 16], strides = [1, 1]} : vector<8x64xbf16> to vector<8x16xbf16>
    %cst_11 = arith.constant dense<0.000000e+00> : vector<8x8xf32>
    %24 = tpu.matmul %22, %23, %cst_11 {dimension_numbers = #tpu.dot_dimension_numbers<[1], [1], [0], [0], [0, 0, 1, 0], [], []>} : vector<8x16xbf16>, vector<8x16xbf16>, vector<8x8xf32> -> vector<8x8xf32>
    %c0_12 = arith.constant 0 : index
    %c0_13 = arith.constant 0 : index
    %25 = memref.load %arg5[%c0_12, %c0_13] : memref<4x4xf32, #tpu.memory_space<smem>>
    %26 = vector.broadcast %25 : f32 to vector<8x8xf32>
    %27 = arith.mulf %15, %26 : vector<8x8xf32>
    %c1 = arith.constant 1 : index
    %c0_14 = arith.constant 0 : index
    %28 = memref.load %arg5[%c1, %c0_14] : memref<4x4xf32, #tpu.memory_space<smem>>
    %29 = vector.broadcast %28 : f32 to vector<8x8xf32>
    %30 = arith.mulf %18, %29 : vector<8x8xf32>
    %31 = arith.addf %27, %30 : vector<8x8xf32>
    %c2 = arith.constant 2 : index
    %c0_15 = arith.constant 0 : index
    %32 = memref.load %arg5[%c2, %c0_15] : memref<4x4xf32, #tpu.memory_space<smem>>
    %33 = vector.broadcast %32 : f32 to vector<8x8xf32>
    %34 = arith.mulf %21, %33 : vector<8x8xf32>
    %35 = arith.addf %31, %34 : vector<8x8xf32>
    %c3 = arith.constant 3 : index
    %c0_16 = arith.constant 0 : index
    %36 = memref.load %arg5[%c3, %c0_16] : memref<4x4xf32, #tpu.memory_space<smem>>
    %37 = vector.broadcast %36 : f32 to vector<8x8xf32>
    %38 = arith.mulf %24, %37 : vector<8x8xf32>
    %39 = arith.addf %35, %38 : vector<8x8xf32>
    %cst_17 = arith.constant dense<0xFF800000> : vector<8xf32>
    %40 = vector.multi_reduction <maximumf>, %39, %cst_17 [1] : vector<8x8xf32> to vector<8xf32>
    %41 = vector.shape_cast %40 : vector<8xf32> to vector<8x1xf32>
    %42 = vector.broadcast %41 : vector<8x1xf32> to vector<8x8xf32>
    %43 = arith.subf %39, %42 : vector<8x8xf32>
    %44 = math.exp %43 : vector<8x8xf32>
    %cst_18 = arith.constant dense<0.000000e+00> : vector<8xf32>
    %45 = vector.multi_reduction <add>, %44, %cst_18 [1] : vector<8x8xf32> to vector<8xf32>
    %46 = vector.shape_cast %45 : vector<8xf32> to vector<8x1xf32>
    %47 = tpu.reciprocal %46 {approx = true} : vector<8x1xf32> -> vector<8x1xf32>
    %48 = vector.broadcast %47 : vector<8x1xf32> to vector<8x8xf32>
    %49 = arith.mulf %44, %48 : vector<8x8xf32>
    %c0_19 = arith.constant 0 : index
    %c1_20 = arith.constant 1 : index
    %50 = memref.load %arg5[%c0_19, %c1_20] : memref<4x4xf32, #tpu.memory_space<smem>>
    %51 = vector.broadcast %50 : f32 to vector<8x8xf32>
    %52 = arith.mulf %15, %51 : vector<8x8xf32>
    %c1_21 = arith.constant 1 : index
    %c1_22 = arith.constant 1 : index
    %53 = memref.load %arg5[%c1_21, %c1_22] : memref<4x4xf32, #tpu.memory_space<smem>>
    %54 = vector.broadcast %53 : f32 to vector<8x8xf32>
    %55 = arith.mulf %18, %54 : vector<8x8xf32>
    %56 = arith.addf %52, %55 : vector<8x8xf32>
    %c2_23 = arith.constant 2 : index
    %c1_24 = arith.constant 1 : index
    %57 = memref.load %arg5[%c2_23, %c1_24] : memref<4x4xf32, #tpu.memory_space<smem>>
    %58 = vector.broadcast %57 : f32 to vector<8x8xf32>
    %59 = arith.mulf %21, %58 : vector<8x8xf32>
    %60 = arith.addf %56, %59 : vector<8x8xf32>
    %c3_25 = arith.constant 3 : index
    %c1_26 = arith.constant 1 : index
    %61 = memref.load %arg5[%c3_25, %c1_26] : memref<4x4xf32, #tpu.memory_space<smem>>
    %62 = vector.broadcast %61 : f32 to vector<8x8xf32>
    %63 = arith.mulf %24, %62 : vector<8x8xf32>
    %64 = arith.addf %60, %63 : vector<8x8xf32>
    %cst_27 = arith.constant dense<0xFF800000> : vector<8xf32>
    %65 = vector.multi_reduction <maximumf>, %64, %cst_27 [1] : vector<8x8xf32> to vector<8xf32>
    %66 = vector.shape_cast %65 : vector<8xf32> to vector<8x1xf32>
    %67 = vector.broadcast %66 : vector<8x1xf32> to vector<8x8xf32>
    %68 = arith.subf %64, %67 : vector<8x8xf32>
    %69 = math.exp %68 : vector<8x8xf32>
    %cst_28 = arith.constant dense<0.000000e+00> : vector<8xf32>
    %70 = vector.multi_reduction <add>, %69, %cst_28 [1] : vector<8x8xf32> to vector<8xf32>
    %71 = vector.shape_cast %70 : vector<8xf32> to vector<8x1xf32>
    %72 = tpu.reciprocal %71 {approx = true} : vector<8x1xf32> -> vector<8x1xf32>
    %73 = vector.broadcast %72 : vector<8x1xf32> to vector<8x8xf32>
    %74 = arith.mulf %69, %73 : vector<8x8xf32>
    %c0_29 = arith.constant 0 : index
    %c2_30 = arith.constant 2 : index
    %75 = memref.load %arg5[%c0_29, %c2_30] : memref<4x4xf32, #tpu.memory_space<smem>>
    %76 = vector.broadcast %75 : f32 to vector<8x8xf32>
    %77 = arith.mulf %15, %76 : vector<8x8xf32>
    %c1_31 = arith.constant 1 : index
    %c2_32 = arith.constant 2 : index
    %78 = memref.load %arg5[%c1_31, %c2_32] : memref<4x4xf32, #tpu.memory_space<smem>>
    %79 = vector.broadcast %78 : f32 to vector<8x8xf32>
    %80 = arith.mulf %18, %79 : vector<8x8xf32>
    %81 = arith.addf %77, %80 : vector<8x8xf32>
    %c2_33 = arith.constant 2 : index
    %c2_34 = arith.constant 2 : index
    %82 = memref.load %arg5[%c2_33, %c2_34] : memref<4x4xf32, #tpu.memory_space<smem>>
    %83 = vector.broadcast %82 : f32 to vector<8x8xf32>
    %84 = arith.mulf %21, %83 : vector<8x8xf32>
    %85 = arith.addf %81, %84 : vector<8x8xf32>
    %c3_35 = arith.constant 3 : index
    %c2_36 = arith.constant 2 : index
    %86 = memref.load %arg5[%c3_35, %c2_36] : memref<4x4xf32, #tpu.memory_space<smem>>
    %87 = vector.broadcast %86 : f32 to vector<8x8xf32>
    %88 = arith.mulf %24, %87 : vector<8x8xf32>
    %89 = arith.addf %85, %88 : vector<8x8xf32>
    %cst_37 = arith.constant dense<0xFF800000> : vector<8xf32>
    %90 = vector.multi_reduction <maximumf>, %89, %cst_37 [1] : vector<8x8xf32> to vector<8xf32>
    %91 = vector.shape_cast %90 : vector<8xf32> to vector<8x1xf32>
    %92 = vector.broadcast %91 : vector<8x1xf32> to vector<8x8xf32>
    %93 = arith.subf %89, %92 : vector<8x8xf32>
    %94 = math.exp %93 : vector<8x8xf32>
    %cst_38 = arith.constant dense<0.000000e+00> : vector<8xf32>
    %95 = vector.multi_reduction <add>, %94, %cst_38 [1] : vector<8x8xf32> to vector<8xf32>
    %96 = vector.shape_cast %95 : vector<8xf32> to vector<8x1xf32>
    %97 = tpu.reciprocal %96 {approx = true} : vector<8x1xf32> -> vector<8x1xf32>
    %98 = vector.broadcast %97 : vector<8x1xf32> to vector<8x8xf32>
    %99 = arith.mulf %94, %98 : vector<8x8xf32>
    %c0_39 = arith.constant 0 : index
    %c3_40 = arith.constant 3 : index
    %100 = memref.load %arg5[%c0_39, %c3_40] : memref<4x4xf32, #tpu.memory_space<smem>>
    %101 = vector.broadcast %100 : f32 to vector<8x8xf32>
    %102 = arith.mulf %15, %101 : vector<8x8xf32>
    %c1_41 = arith.constant 1 : index
    %c3_42 = arith.constant 3 : index
    %103 = memref.load %arg5[%c1_41, %c3_42] : memref<4x4xf32, #tpu.memory_space<smem>>
    %104 = vector.broadcast %103 : f32 to vector<8x8xf32>
    %105 = arith.mulf %18, %104 : vector<8x8xf32>
    %106 = arith.addf %102, %105 : vector<8x8xf32>
    %c2_43 = arith.constant 2 : index
    %c3_44 = arith.constant 3 : index
    %107 = memref.load %arg5[%c2_43, %c3_44] : memref<4x4xf32, #tpu.memory_space<smem>>
    %108 = vector.broadcast %107 : f32 to vector<8x8xf32>
    %109 = arith.mulf %21, %108 : vector<8x8xf32>
    %110 = arith.addf %106, %109 : vector<8x8xf32>
    %c3_45 = arith.constant 3 : index
    %c3_46 = arith.constant 3 : index
    %111 = memref.load %arg5[%c3_45, %c3_46] : memref<4x4xf32, #tpu.memory_space<smem>>
    %112 = vector.broadcast %111 : f32 to vector<8x8xf32>
    %113 = arith.mulf %24, %112 : vector<8x8xf32>
    %114 = arith.addf %110, %113 : vector<8x8xf32>
    %cst_47 = arith.constant dense<0xFF800000> : vector<8xf32>
    %115 = vector.multi_reduction <maximumf>, %114, %cst_47 [1] : vector<8x8xf32> to vector<8xf32>
    %116 = vector.shape_cast %115 : vector<8xf32> to vector<8x1xf32>
    %117 = vector.broadcast %116 : vector<8x1xf32> to vector<8x8xf32>
    %118 = arith.subf %114, %117 : vector<8x8xf32>
    %119 = math.exp %118 : vector<8x8xf32>
    %cst_48 = arith.constant dense<0.000000e+00> : vector<8xf32>
    %120 = vector.multi_reduction <add>, %119, %cst_48 [1] : vector<8x8xf32> to vector<8xf32>
    %121 = vector.shape_cast %120 : vector<8xf32> to vector<8x1xf32>
    %122 = tpu.reciprocal %121 {approx = true} : vector<8x1xf32> -> vector<8x1xf32>
    %123 = vector.broadcast %122 : vector<8x1xf32> to vector<8x8xf32>
    %124 = arith.mulf %119, %123 : vector<8x8xf32>
    %c0_49 = arith.constant 0 : index
    %c0_50 = arith.constant 0 : index
    %125 = memref.load %arg6[%c0_49, %c0_50] : memref<4x4xf32, #tpu.memory_space<smem>>
    %126 = vector.broadcast %125 : f32 to vector<8x8xf32>
    %127 = arith.mulf %49, %126 : vector<8x8xf32>
    %c1_51 = arith.constant 1 : index
    %c0_52 = arith.constant 0 : index
    %128 = memref.load %arg6[%c1_51, %c0_52] : memref<4x4xf32, #tpu.memory_space<smem>>
    %129 = vector.broadcast %128 : f32 to vector<8x8xf32>
    %130 = arith.mulf %74, %129 : vector<8x8xf32>
    %131 = arith.addf %127, %130 : vector<8x8xf32>
    %c2_53 = arith.constant 2 : index
    %c0_54 = arith.constant 0 : index
    %132 = memref.load %arg6[%c2_53, %c0_54] : memref<4x4xf32, #tpu.memory_space<smem>>
    %133 = vector.broadcast %132 : f32 to vector<8x8xf32>
    %134 = arith.mulf %99, %133 : vector<8x8xf32>
    %135 = arith.addf %131, %134 : vector<8x8xf32>
    %c3_55 = arith.constant 3 : index
    %c0_56 = arith.constant 0 : index
    %136 = memref.load %arg6[%c3_55, %c0_56] : memref<4x4xf32, #tpu.memory_space<smem>>
    %137 = vector.broadcast %136 : f32 to vector<8x8xf32>
    %138 = arith.mulf %124, %137 : vector<8x8xf32>
    %139 = arith.addf %135, %138 : vector<8x8xf32>
    %140 = vector.extract_strided_slice %11 {offsets = [0, 0], sizes = [8, 16], strides = [1, 1]} : vector<8x64xbf16> to vector<8x16xbf16>
    %141 = arith.truncf %139 : vector<8x8xf32> to vector<8x8xbf16>
    %cst_57 = arith.constant dense<0.000000e+00> : vector<8x16xf32>
    %142 = tpu.matmul %141, %140, %cst_57 {dimension_numbers = #tpu.dot_dimension_numbers<[1], [0], [0], [1], [0, 0, 1, 1], [], []>} : vector<8x8xbf16>, vector<8x16xbf16>, vector<8x16xf32> -> vector<8x16xf32>
    %143 = arith.truncf %142 : vector<8x16xf32> to vector<8x16xbf16>
    %c0_58 = arith.constant 0 : index
    %c0_59 = arith.constant 0 : index
    %c0_60 = arith.constant 0 : index
    %144 = vector.load %arg11[%c0_58, %c0_59, %c0_60] : memref<2x8x64xbf16, #tpu.memory_space<vmem>>, vector<1x8x16xbf16>
    %145 = vector.shape_cast %144 : vector<1x8x16xbf16> to vector<8x16xbf16>
    %146 = vector.shape_cast %143 : vector<8x16xbf16> to vector<1x8x16xbf16>
    tpu.vector_store %arg11[%c0_58, %c0_59, %c0_60], %146 {strides = array<i32>} : memref<2x8x64xbf16, #tpu.memory_space<vmem>>, vector<1x8x16xbf16>,
    %c0_61 = arith.constant 0 : index
    %c1_62 = arith.constant 1 : index
    %147 = memref.load %arg6[%c0_61, %c1_62] : memref<4x4xf32, #tpu.memory_space<smem>>
    %148 = vector.broadcast %147 : f32 to vector<8x8xf32>
    %149 = arith.mulf %49, %148 : vector<8x8xf32>
    %c1_63 = arith.constant 1 : index
    %c1_64 = arith.constant 1 : index
    %150 = memref.load %arg6[%c1_63, %c1_64] : memref<4x4xf32, #tpu.memory_space<smem>>
    %151 = vector.broadcast %150 : f32 to vector<8x8xf32>
    %152 = arith.mulf %74, %151 : vector<8x8xf32>
    %153 = arith.addf %149, %152 : vector<8x8xf32>
    %c2_65 = arith.constant 2 : index
    %c1_66 = arith.constant 1 : index
    %154 = memref.load %arg6[%c2_65, %c1_66] : memref<4x4xf32, #tpu.memory_space<smem>>
    %155 = vector.broadcast %154 : f32 to vector<8x8xf32>
    %156 = arith.mulf %99, %155 : vector<8x8xf32>
    %157 = arith.addf %153, %156 : vector<8x8xf32>
    %c3_67 = arith.constant 3 : index
    %c1_68 = arith.constant 1 : index
    %158 = memref.load %arg6[%c3_67, %c1_68] : memref<4x4xf32, #tpu.memory_space<smem>>
    %159 = vector.broadcast %158 : f32 to vector<8x8xf32>
    %160 = arith.mulf %124, %159 : vector<8x8xf32>
    %161 = arith.addf %157, %160 : vector<8x8xf32>
    %162 = vector.extract_strided_slice %11 {offsets = [0, 16], sizes = [8, 16], strides = [1, 1]} : vector<8x64xbf16> to vector<8x16xbf16>
    %163 = arith.truncf %161 : vector<8x8xf32> to vector<8x8xbf16>
    %cst_69 = arith.constant dense<0.000000e+00> : vector<8x16xf32>
    %164 = tpu.matmul %163, %162, %cst_69 {dimension_numbers = #tpu.dot_dimension_numbers<[1], [0], [0], [1], [0, 0, 1, 1], [], []>} : vector<8x8xbf16>, vector<8x16xbf16>, vector<8x16xf32> -> vector<8x16xf32>
    %165 = arith.truncf %164 : vector<8x16xf32> to vector<8x16xbf16>
    %c0_70 = arith.constant 0 : index
    %c0_71 = arith.constant 0 : index
    %c16 = arith.constant 16 : index
    %166 = vector.load %arg11[%c0_70, %c0_71, %c16] : memref<2x8x64xbf16, #tpu.memory_space<vmem>>, vector<1x8x16xbf16>
    %167 = vector.shape_cast %166 : vector<1x8x16xbf16> to vector<8x16xbf16>
    %168 = vector.shape_cast %165 : vector<8x16xbf16> to vector<1x8x16xbf16>
    tpu.vector_store %arg11[%c0_70, %c0_71, %c16], %168 {strides = array<i32>} : memref<2x8x64xbf16, #tpu.memory_space<vmem>>, vector<1x8x16xbf16>,
    %c0_72 = arith.constant 0 : index
    %c2_73 = arith.constant 2 : index
    %169 = memref.load %arg6[%c0_72, %c2_73] : memref<4x4xf32, #tpu.memory_space<smem>>
    %170 = vector.broadcast %169 : f32 to vector<8x8xf32>
    %171 = arith.mulf %49, %170 : vector<8x8xf32>
    %c1_74 = arith.constant 1 : index
    %c2_75 = arith.constant 2 : index
    %172 = memref.load %arg6[%c1_74, %c2_75] : memref<4x4xf32, #tpu.memory_space<smem>>
    %173 = vector.broadcast %172 : f32 to vector<8x8xf32>
    %174 = arith.mulf %74, %173 : vector<8x8xf32>
    %175 = arith.addf %171, %174 : vector<8x8xf32>
    %c2_76 = arith.constant 2 : index
    %c2_77 = arith.constant 2 : index
    %176 = memref.load %arg6[%c2_76, %c2_77] : memref<4x4xf32, #tpu.memory_space<smem>>
    %177 = vector.broadcast %176 : f32 to vector<8x8xf32>
    %178 = arith.mulf %99, %177 : vector<8x8xf32>
    %179 = arith.addf %175, %178 : vector<8x8xf32>
    %c3_78 = arith.constant 3 : index
    %c2_79 = arith.constant 2 : index
    %180 = memref.load %arg6[%c3_78, %c2_79] : memref<4x4xf32, #tpu.memory_space<smem>>
    %181 = vector.broadcast %180 : f32 to vector<8x8xf32>
    %182 = arith.mulf %124, %181 : vector<8x8xf32>
    %183 = arith.addf %179, %182 : vector<8x8xf32>
    %184 = vector.extract_strided_slice %11 {offsets = [0, 32], sizes = [8, 16], strides = [1, 1]} : vector<8x64xbf16> to vector<8x16xbf16>
    %185 = arith.truncf %183 : vector<8x8xf32> to vector<8x8xbf16>
    %cst_80 = arith.constant dense<0.000000e+00> : vector<8x16xf32>
    %186 = tpu.matmul %185, %184, %cst_80 {dimension_numbers = #tpu.dot_dimension_numbers<[1], [0], [0], [1], [0, 0, 1, 1], [], []>} : vector<8x8xbf16>, vector<8x16xbf16>, vector<8x16xf32> -> vector<8x16xf32>
    %187 = arith.truncf %186 : vector<8x16xf32> to vector<8x16xbf16>
    %c0_81 = arith.constant 0 : index
    %c0_82 = arith.constant 0 : index
    %c32 = arith.constant 32 : index
    %188 = vector.load %arg11[%c0_81, %c0_82, %c32] : memref<2x8x64xbf16, #tpu.memory_space<vmem>>, vector<1x8x16xbf16>
    %189 = vector.shape_cast %188 : vector<1x8x16xbf16> to vector<8x16xbf16>
    %190 = vector.shape_cast %187 : vector<8x16xbf16> to vector<1x8x16xbf16>
    tpu.vector_store %arg11[%c0_81, %c0_82, %c32], %190 {strides = array<i32>} : memref<2x8x64xbf16, #tpu.memory_space<vmem>>, vector<1x8x16xbf16>,
    %c0_83 = arith.constant 0 : index
    %c3_84 = arith.constant 3 : index
    %191 = memref.load %arg6[%c0_83, %c3_84] : memref<4x4xf32, #tpu.memory_space<smem>>
    %192 = vector.broadcast %191 : f32 to vector<8x8xf32>
    %193 = arith.mulf %49, %192 : vector<8x8xf32>
    %c1_85 = arith.constant 1 : index
    %c3_86 = arith.constant 3 : index
    %194 = memref.load %arg6[%c1_85, %c3_86] : memref<4x4xf32, #tpu.memory_space<smem>>
    %195 = vector.broadcast %194 : f32 to vector<8x8xf32>
    %196 = arith.mulf %74, %195 : vector<8x8xf32>
    %197 = arith.addf %193, %196 : vector<8x8xf32>
    %c2_87 = arith.constant 2 : index
    %c3_88 = arith.constant 3 : index
    %198 = memref.load %arg6[%c2_87, %c3_88] : memref<4x4xf32, #tpu.memory_space<smem>>
    %199 = vector.broadcast %198 : f32 to vector<8x8xf32>
    %200 = arith.mulf %99, %199 : vector<8x8xf32>
    %201 = arith.addf %197, %200 : vector<8x8xf32>
    %c3_89 = arith.constant 3 : index
    %c3_90 = arith.constant 3 : index
    %202 = memref.load %arg6[%c3_89, %c3_90] : memref<4x4xf32, #tpu.memory_space<smem>>
    %203 = vector.broadcast %202 : f32 to vector<8x8xf32>
    %204 = arith.mulf %124, %203 : vector<8x8xf32>
    %205 = arith.addf %201, %204 : vector<8x8xf32>
    %206 = vector.extract_strided_slice %11 {offsets = [0, 48], sizes = [8, 16], strides = [1, 1]} : vector<8x64xbf16> to vector<8x16xbf16>
    %207 = arith.truncf %205 : vector<8x8xf32> to vector<8x8xbf16>
    %cst_91 = arith.constant dense<0.000000e+00> : vector<8x16xf32>
    %208 = tpu.matmul %207, %206, %cst_91 {dimension_numbers = #tpu.dot_dimension_numbers<[1], [0], [0], [1], [0, 0, 1, 1], [], []>} : vector<8x8xbf16>, vector<8x16xbf16>, vector<8x16xf32> -> vector<8x16xf32>
    %209 = arith.truncf %208 : vector<8x16xf32> to vector<8x16xbf16>
    %c0_92 = arith.constant 0 : index
    %c0_93 = arith.constant 0 : index
    %c48 = arith.constant 48 : index
    %210 = vector.load %arg11[%c0_92, %c0_93, %c48] : memref<2x8x64xbf16, #tpu.memory_space<vmem>>, vector<1x8x16xbf16>
    %211 = vector.shape_cast %210 : vector<1x8x16xbf16> to vector<8x16xbf16>
    %212 = vector.shape_cast %209 : vector<8x16xbf16> to vector<1x8x16xbf16>
    tpu.vector_store %arg11[%c0_92, %c0_93, %c48], %212 {strides = array<i32>} : memref<2x8x64xbf16, #tpu.memory_space<vmem>>, vector<1x8x16xbf16>,
    %c1_94 = arith.constant 1 : index
    %c0_95 = arith.constant 0 : index
    %c0_96 = arith.constant 0 : index
    %213 = vector.load %arg10[%c1_94, %c0_95, %c0_96] : memref<2x8x128xbf16, #tpu.memory_space<vmem>>, vector<1x8x128xbf16>
    %214 = vector.shape_cast %213 : vector<1x8x128xbf16> to vector<8x128xbf16>
    %215 = vector.extract_strided_slice %214 {offsets = [0, 0], sizes = [8, 64], strides = [1, 1]} : vector<8x128xbf16> to vector<8x64xbf16>
    %216 = vector.extract_strided_slice %214 {offsets = [0, 64], sizes = [8, 64], strides = [1, 1]} : vector<8x128xbf16> to vector<8x64xbf16>
    %217 = vector.extract_strided_slice %7 {offsets = [8, 0], sizes = [8, 64], strides = [1, 1]} : vector<16x64xbf16> to vector<8x64xbf16>
    %218 = vector.extract_strided_slice %217 {offsets = [0, 0], sizes = [8, 16], strides = [1, 1]} : vector<8x64xbf16> to vector<8x16xbf16>
    %219 = vector.extract_strided_slice %215 {offsets = [0, 0], sizes = [8, 16], strides = [1, 1]} : vector<8x64xbf16> to vector<8x16xbf16>
    %cst_97 = arith.constant dense<0.000000e+00> : vector<8x8xf32>
    %220 = tpu.matmul %218, %219, %cst_97 {dimension_numbers = #tpu.dot_dimension_numbers<[1], [1], [0], [0], [0, 0, 1, 0], [], []>} : vector<8x16xbf16>, vector<8x16xbf16>, vector<8x8xf32> -> vector<8x8xf32>
    %221 = vector.extract_strided_slice %217 {offsets = [0, 16], sizes = [8, 16], strides = [1, 1]} : vector<8x64xbf16> to vector<8x16xbf16>
    %222 = vector.extract_strided_slice %215 {offsets = [0, 16], sizes = [8, 16], strides = [1, 1]} : vector<8x64xbf16> to vector<8x16xbf16>
    %cst_98 = arith.constant dense<0.000000e+00> : vector<8x8xf32>
    %223 = tpu.matmul %221, %222, %cst_98 {dimension_numbers = #tpu.dot_dimension_numbers<[1], [1], [0], [0], [0, 0, 1, 0], [], []>} : vector<8x16xbf16>, vector<8x16xbf16>, vector<8x8xf32> -> vector<8x8xf32>
    %224 = vector.extract_strided_slice %217 {offsets = [0, 32], sizes = [8, 16], strides = [1, 1]} : vector<8x64xbf16> to vector<8x16xbf16>
    %225 = vector.extract_strided_slice %215 {offsets = [0, 32], sizes = [8, 16], strides = [1, 1]} : vector<8x64xbf16> to vector<8x16xbf16>
    %cst_99 = arith.constant dense<0.000000e+00> : vector<8x8xf32>
    %226 = tpu.matmul %224, %225, %cst_99 {dimension_numbers = #tpu.dot_dimension_numbers<[1], [1], [0], [0], [0, 0, 1, 0], [], []>} : vector<8x16xbf16>, vector<8x16xbf16>, vector<8x8xf32> -> vector<8x8xf32>
    %227 = vector.extract_strided_slice %217 {offsets = [0, 48], sizes = [8, 16], strides = [1, 1]} : vector<8x64xbf16> to vector<8x16xbf16>
    %228 = vector.extract_strided_slice %215 {offsets = [0, 48], sizes = [8, 16], strides = [1, 1]} : vector<8x64xbf16> to vector<8x16xbf16>
    %cst_100 = arith.constant dense<0.000000e+00> : vector<8x8xf32>
    %229 = tpu.matmul %227, %228, %cst_100 {dimension_numbers = #tpu.dot_dimension_numbers<[1], [1], [0], [0], [0, 0, 1, 0], [], []>} : vector<8x16xbf16>, vector<8x16xbf16>, vector<8x8xf32> -> vector<8x8xf32>
    %c0_101 = arith.constant 0 : index
    %c0_102 = arith.constant 0 : index
    %230 = memref.load %arg5[%c0_101, %c0_102] : memref<4x4xf32, #tpu.memory_space<smem>>
    %231 = vector.broadcast %230 : f32 to vector<8x8xf32>
    %232 = arith.mulf %220, %231 : vector<8x8xf32>
    %c1_103 = arith.constant 1 : index
    %c0_104 = arith.constant 0 : index
    %233 = memref.load %arg5[%c1_103, %c0_104] : memref<4x4xf32, #tpu.memory_space<smem>>
    %234 = vector.broadcast %233 : f32 to vector<8x8xf32>
    %235 = arith.mulf %223, %234 : vector<8x8xf32>
    %236 = arith.addf %232, %235 : vector<8x8xf32>
    %c2_105 = arith.constant 2 : index
    %c0_106 = arith.constant 0 : index
    %237 = memref.load %arg5[%c2_105, %c0_106] : memref<4x4xf32, #tpu.memory_space<smem>>
    %238 = vector.broadcast %237 : f32 to vector<8x8xf32>
    %239 = arith.mulf %226, %238 : vector<8x8xf32>
    %240 = arith.addf %236, %239 : vector<8x8xf32>
    %c3_107 = arith.constant 3 : index
    %c0_108 = arith.constant 0 : index
    %241 = memref.load %arg5[%c3_107, %c0_108] : memref<4x4xf32, #tpu.memory_space<smem>>
    %242 = vector.broadcast %241 : f32 to vector<8x8xf32>
    %243 = arith.mulf %229, %242 : vector<8x8xf32>
    %244 = arith.addf %240, %243 : vector<8x8xf32>
    %cst_109 = arith.constant dense<0xFF800000> : vector<8xf32>
    %245 = vector.multi_reduction <maximumf>, %244, %cst_109 [1] : vector<8x8xf32> to vector<8xf32>
    %246 = vector.shape_cast %245 : vector<8xf32> to vector<8x1xf32>
    %247 = vector.broadcast %246 : vector<8x1xf32> to vector<8x8xf32>
    %248 = arith.subf %244, %247 : vector<8x8xf32>
    %249 = math.exp %248 : vector<8x8xf32>
    %cst_110 = arith.constant dense<0.000000e+00> : vector<8xf32>
    %250 = vector.multi_reduction <add>, %249, %cst_110 [1] : vector<8x8xf32> to vector<8xf32>
    %251 = vector.shape_cast %250 : vector<8xf32> to vector<8x1xf32>
    %252 = tpu.reciprocal %251 {approx = true} : vector<8x1xf32> -> vector<8x1xf32>
    %253 = vector.broadcast %252 : vector<8x1xf32> to vector<8x8xf32>
    %254 = arith.mulf %249, %253 : vector<8x8xf32>
    %c0_111 = arith.constant 0 : index
    %c1_112 = arith.constant 1 : index
    %255 = memref.load %arg5[%c0_111, %c1_112] : memref<4x4xf32, #tpu.memory_space<smem>>
    %256 = vector.broadcast %255 : f32 to vector<8x8xf32>
    %257 = arith.mulf %220, %256 : vector<8x8xf32>
    %c1_113 = arith.constant 1 : index
    %c1_114 = arith.constant 1 : index
    %258 = memref.load %arg5[%c1_113, %c1_114] : memref<4x4xf32, #tpu.memory_space<smem>>
    %259 = vector.broadcast %258 : f32 to vector<8x8xf32>
    %260 = arith.mulf %223, %259 : vector<8x8xf32>
    %261 = arith.addf %257, %260 : vector<8x8xf32>
    %c2_115 = arith.constant 2 : index
    %c1_116 = arith.constant 1 : index
    %262 = memref.load %arg5[%c2_115, %c1_116] : memref<4x4xf32, #tpu.memory_space<smem>>
    %263 = vector.broadcast %262 : f32 to vector<8x8xf32>
    %264 = arith.mulf %226, %263 : vector<8x8xf32>
    %265 = arith.addf %261, %264 : vector<8x8xf32>
    %c3_117 = arith.constant 3 : index
    %c1_118 = arith.constant 1 : index
    %266 = memref.load %arg5[%c3_117, %c1_118] : memref<4x4xf32, #tpu.memory_space<smem>>
    %267 = vector.broadcast %266 : f32 to vector<8x8xf32>
    %268 = arith.mulf %229, %267 : vector<8x8xf32>
    %269 = arith.addf %265, %268 : vector<8x8xf32>
    %cst_119 = arith.constant dense<0xFF800000> : vector<8xf32>
    %270 = vector.multi_reduction <maximumf>, %269, %cst_119 [1] : vector<8x8xf32> to vector<8xf32>
    %271 = vector.shape_cast %270 : vector<8xf32> to vector<8x1xf32>
    %272 = vector.broadcast %271 : vector<8x1xf32> to vector<8x8xf32>
    %273 = arith.subf %269, %272 : vector<8x8xf32>
    %274 = math.exp %273 : vector<8x8xf32>
    %cst_120 = arith.constant dense<0.000000e+00> : vector<8xf32>
    %275 = vector.multi_reduction <add>, %274, %cst_120 [1] : vector<8x8xf32> to vector<8xf32>
    %276 = vector.shape_cast %275 : vector<8xf32> to vector<8x1xf32>
    %277 = tpu.reciprocal %276 {approx = true} : vector<8x1xf32> -> vector<8x1xf32>
    %278 = vector.broadcast %277 : vector<8x1xf32> to vector<8x8xf32>
    %279 = arith.mulf %274, %278 : vector<8x8xf32>
    %c0_121 = arith.constant 0 : index
    %c2_122 = arith.constant 2 : index
    %280 = memref.load %arg5[%c0_121, %c2_122] : memref<4x4xf32, #tpu.memory_space<smem>>
    %281 = vector.broadcast %280 : f32 to vector<8x8xf32>
    %282 = arith.mulf %220, %281 : vector<8x8xf32>
    %c1_123 = arith.constant 1 : index
    %c2_124 = arith.constant 2 : index
    %283 = memref.load %arg5[%c1_123, %c2_124] : memref<4x4xf32, #tpu.memory_space<smem>>
    %284 = vector.broadcast %283 : f32 to vector<8x8xf32>
    %285 = arith.mulf %223, %284 : vector<8x8xf32>
    %286 = arith.addf %282, %285 : vector<8x8xf32>
    %c2_125 = arith.constant 2 : index
    %c2_126 = arith.constant 2 : index
    %287 = memref.load %arg5[%c2_125, %c2_126] : memref<4x4xf32, #tpu.memory_space<smem>>
    %288 = vector.broadcast %287 : f32 to vector<8x8xf32>
    %289 = arith.mulf %226, %288 : vector<8x8xf32>
    %290 = arith.addf %286, %289 : vector<8x8xf32>
    %c3_127 = arith.constant 3 : index
    %c2_128 = arith.constant 2 : index
    %291 = memref.load %arg5[%c3_127, %c2_128] : memref<4x4xf32, #tpu.memory_space<smem>>
    %292 = vector.broadcast %291 : f32 to vector<8x8xf32>
    %293 = arith.mulf %229, %292 : vector<8x8xf32>
    %294 = arith.addf %290, %293 : vector<8x8xf32>
    %cst_129 = arith.constant dense<0xFF800000> : vector<8xf32>
    %295 = vector.multi_reduction <maximumf>, %294, %cst_129 [1] : vector<8x8xf32> to vector<8xf32>
    %296 = vector.shape_cast %295 : vector<8xf32> to vector<8x1xf32>
    %297 = vector.broadcast %296 : vector<8x1xf32> to vector<8x8xf32>
    %298 = arith.subf %294, %297 : vector<8x8xf32>
    %299 = math.exp %298 : vector<8x8xf32>
    %cst_130 = arith.constant dense<0.000000e+00> : vector<8xf32>
    %300 = vector.multi_reduction <add>, %299, %cst_130 [1] : vector<8x8xf32> to vector<8xf32>
    %301 = vector.shape_cast %300 : vector<8xf32> to vector<8x1xf32>
    %302 = tpu.reciprocal %301 {approx = true} : vector<8x1xf32> -> vector<8x1xf32>
    %303 = vector.broadcast %302 : vector<8x1xf32> to vector<8x8xf32>
    %304 = arith.mulf %299, %303 : vector<8x8xf32>
    %c0_131 = arith.constant 0 : index
    %c3_132 = arith.constant 3 : index
    %305 = memref.load %arg5[%c0_131, %c3_132] : memref<4x4xf32, #tpu.memory_space<smem>>
    %306 = vector.broadcast %305 : f32 to vector<8x8xf32>
    %307 = arith.mulf %220, %306 : vector<8x8xf32>
    %c1_133 = arith.constant 1 : index
    %c3_134 = arith.constant 3 : index
    %308 = memref.load %arg5[%c1_133, %c3_134] : memref<4x4xf32, #tpu.memory_space<smem>>
    %309 = vector.broadcast %308 : f32 to vector<8x8xf32>
    %310 = arith.mulf %223, %309 : vector<8x8xf32>
    %311 = arith.addf %307, %310 : vector<8x8xf32>
    %c2_135 = arith.constant 2 : index
    %c3_136 = arith.constant 3 : index
    %312 = memref.load %arg5[%c2_135, %c3_136] : memref<4x4xf32, #tpu.memory_space<smem>>
    %313 = vector.broadcast %312 : f32 to vector<8x8xf32>
    %314 = arith.mulf %226, %313 : vector<8x8xf32>
    %315 = arith.addf %311, %314 : vector<8x8xf32>
    %c3_137 = arith.constant 3 : index
    %c3_138 = arith.constant 3 : index
    %316 = memref.load %arg5[%c3_137, %c3_138] : memref<4x4xf32, #tpu.memory_space<smem>>
    %317 = vector.broadcast %316 : f32 to vector<8x8xf32>
    %318 = arith.mulf %229, %317 : vector<8x8xf32>
    %319 = arith.addf %315, %318 : vector<8x8xf32>
    %cst_139 = arith.constant dense<0xFF800000> : vector<8xf32>
    %320 = vector.multi_reduction <maximumf>, %319, %cst_139 [1] : vector<8x8xf32> to vector<8xf32>
    %321 = vector.shape_cast %320 : vector<8xf32> to vector<8x1xf32>
    %322 = vector.broadcast %321 : vector<8x1xf32> to vector<8x8xf32>
    %323 = arith.subf %319, %322 : vector<8x8xf32>
    %324 = math.exp %323 : vector<8x8xf32>
    %cst_140 = arith.constant dense<0.000000e+00> : vector<8xf32>
    %325 = vector.multi_reduction <add>, %324, %cst_140 [1] : vector<8x8xf32> to vector<8xf32>
    %326 = vector.shape_cast %325 : vector<8xf32> to vector<8x1xf32>
    %327 = tpu.reciprocal %326 {approx = true} : vector<8x1xf32> -> vector<8x1xf32>
    %328 = vector.broadcast %327 : vector<8x1xf32> to vector<8x8xf32>
    %329 = arith.mulf %324, %328 : vector<8x8xf32>
    %c0_141 = arith.constant 0 : index
    %c0_142 = arith.constant 0 : index
    %330 = memref.load %arg6[%c0_141, %c0_142] : memref<4x4xf32, #tpu.memory_space<smem>>
    %331 = vector.broadcast %330 : f32 to vector<8x8xf32>
    %332 = arith.mulf %254, %331 : vector<8x8xf32>
    %c1_143 = arith.constant 1 : index
    %c0_144 = arith.constant 0 : index
    %333 = memref.load %arg6[%c1_143, %c0_144] : memref<4x4xf32, #tpu.memory_space<smem>>
    %334 = vector.broadcast %333 : f32 to vector<8x8xf32>
    %335 = arith.mulf %279, %334 : vector<8x8xf32>
    %336 = arith.addf %332, %335 : vector<8x8xf32>
    %c2_145 = arith.constant 2 : index
    %c0_146 = arith.constant 0 : index
    %337 = memref.load %arg6[%c2_145, %c0_146] : memref<4x4xf32, #tpu.memory_space<smem>>
    %338 = vector.broadcast %337 : f32 to vector<8x8xf32>
    %339 = arith.mulf %304, %338 : vector<8x8xf32>
    %340 = arith.addf %336, %339 : vector<8x8xf32>
    %c3_147 = arith.constant 3 : index
    %c0_148 = arith.constant 0 : index
    %341 = memref.load %arg6[%c3_147, %c0_148] : memref<4x4xf32, #tpu.memory_space<smem>>
    %342 = vector.broadcast %341 : f32 to vector<8x8xf32>
    %343 = arith.mulf %329, %342 : vector<8x8xf32>
    %344 = arith.addf %340, %343 : vector<8x8xf32>
    %345 = vector.extract_strided_slice %216 {offsets = [0, 0], sizes = [8, 16], strides = [1, 1]} : vector<8x64xbf16> to vector<8x16xbf16>
    %346 = arith.truncf %344 : vector<8x8xf32> to vector<8x8xbf16>
    %cst_149 = arith.constant dense<0.000000e+00> : vector<8x16xf32>
    %347 = tpu.matmul %346, %345, %cst_149 {dimension_numbers = #tpu.dot_dimension_numbers<[1], [0], [0], [1], [0, 0, 1, 1], [], []>} : vector<8x8xbf16>, vector<8x16xbf16>, vector<8x16xf32> -> vector<8x16xf32>
    %348 = arith.truncf %347 : vector<8x16xf32> to vector<8x16xbf16>
    %c1_150 = arith.constant 1 : index
    %c0_151 = arith.constant 0 : index
    %c0_152 = arith.constant 0 : index
    %349 = vector.load %arg11[%c1_150, %c0_151, %c0_152] : memref<2x8x64xbf16, #tpu.memory_space<vmem>>, vector<1x8x16xbf16>
    %350 = vector.shape_cast %349 : vector<1x8x16xbf16> to vector<8x16xbf16>
    %351 = vector.shape_cast %348 : vector<8x16xbf16> to vector<1x8x16xbf16>
    tpu.vector_store %arg11[%c1_150, %c0_151, %c0_152], %351 {strides = array<i32>} : memref<2x8x64xbf16, #tpu.memory_space<vmem>>, vector<1x8x16xbf16>,
    %c0_153 = arith.constant 0 : index
    %c1_154 = arith.constant 1 : index
    %352 = memref.load %arg6[%c0_153, %c1_154] : memref<4x4xf32, #tpu.memory_space<smem>>
    %353 = vector.broadcast %352 : f32 to vector<8x8xf32>
    %354 = arith.mulf %254, %353 : vector<8x8xf32>
    %c1_155 = arith.constant 1 : index
    %c1_156 = arith.constant 1 : index
    %355 = memref.load %arg6[%c1_155, %c1_156] : memref<4x4xf32, #tpu.memory_space<smem>>
    %356 = vector.broadcast %355 : f32 to vector<8x8xf32>
    %357 = arith.mulf %279, %356 : vector<8x8xf32>
    %358 = arith.addf %354, %357 : vector<8x8xf32>
    %c2_157 = arith.constant 2 : index
    %c1_158 = arith.constant 1 : index
    %359 = memref.load %arg6[%c2_157, %c1_158] : memref<4x4xf32, #tpu.memory_space<smem>>
    %360 = vector.broadcast %359 : f32 to vector<8x8xf32>
    %361 = arith.mulf %304, %360 : vector<8x8xf32>
    %362 = arith.addf %358, %361 : vector<8x8xf32>
    %c3_159 = arith.constant 3 : index
    %c1_160 = arith.constant 1 : index
    %363 = memref.load %arg6[%c3_159, %c1_160] : memref<4x4xf32, #tpu.memory_space<smem>>
    %364 = vector.broadcast %363 : f32 to vector<8x8xf32>
    %365 = arith.mulf %329, %364 : vector<8x8xf32>
    %366 = arith.addf %362, %365 : vector<8x8xf32>
    %367 = vector.extract_strided_slice %216 {offsets = [0, 16], sizes = [8, 16], strides = [1, 1]} : vector<8x64xbf16> to vector<8x16xbf16>
    %368 = arith.truncf %366 : vector<8x8xf32> to vector<8x8xbf16>
    %cst_161 = arith.constant dense<0.000000e+00> : vector<8x16xf32>
    %369 = tpu.matmul %368, %367, %cst_161 {dimension_numbers = #tpu.dot_dimension_numbers<[1], [0], [0], [1], [0, 0, 1, 1], [], []>} : vector<8x8xbf16>, vector<8x16xbf16>, vector<8x16xf32> -> vector<8x16xf32>
    %370 = arith.truncf %369 : vector<8x16xf32> to vector<8x16xbf16>
    %c1_162 = arith.constant 1 : index
    %c0_163 = arith.constant 0 : index
    %c16_164 = arith.constant 16 : index
    %371 = vector.load %arg11[%c1_162, %c0_163, %c16_164] : memref<2x8x64xbf16, #tpu.memory_space<vmem>>, vector<1x8x16xbf16>
    %372 = vector.shape_cast %371 : vector<1x8x16xbf16> to vector<8x16xbf16>
    %373 = vector.shape_cast %370 : vector<8x16xbf16> to vector<1x8x16xbf16>
    tpu.vector_store %arg11[%c1_162, %c0_163, %c16_164], %373 {strides = array<i32>} : memref<2x8x64xbf16, #tpu.memory_space<vmem>>, vector<1x8x16xbf16>,
    %c0_165 = arith.constant 0 : index
    %c2_166 = arith.constant 2 : index
    %374 = memref.load %arg6[%c0_165, %c2_166] : memref<4x4xf32, #tpu.memory_space<smem>>
    %375 = vector.broadcast %374 : f32 to vector<8x8xf32>
    %376 = arith.mulf %254, %375 : vector<8x8xf32>
    %c1_167 = arith.constant 1 : index
    %c2_168 = arith.constant 2 : index
    %377 = memref.load %arg6[%c1_167, %c2_168] : memref<4x4xf32, #tpu.memory_space<smem>>
    %378 = vector.broadcast %377 : f32 to vector<8x8xf32>
    %379 = arith.mulf %279, %378 : vector<8x8xf32>
    %380 = arith.addf %376, %379 : vector<8x8xf32>
    %c2_169 = arith.constant 2 : index
    %c2_170 = arith.constant 2 : index
    %381 = memref.load %arg6[%c2_169, %c2_170] : memref<4x4xf32, #tpu.memory_space<smem>>
    %382 = vector.broadcast %381 : f32 to vector<8x8xf32>
    %383 = arith.mulf %304, %382 : vector<8x8xf32>
    %384 = arith.addf %380, %383 : vector<8x8xf32>
    %c3_171 = arith.constant 3 : index
    %c2_172 = arith.constant 2 : index
    %385 = memref.load %arg6[%c3_171, %c2_172] : memref<4x4xf32, #tpu.memory_space<smem>>
    %386 = vector.broadcast %385 : f32 to vector<8x8xf32>
    %387 = arith.mulf %329, %386 : vector<8x8xf32>
    %388 = arith.addf %384, %387 : vector<8x8xf32>
    %389 = vector.extract_strided_slice %216 {offsets = [0, 32], sizes = [8, 16], strides = [1, 1]} : vector<8x64xbf16> to vector<8x16xbf16>
    %390 = arith.truncf %388 : vector<8x8xf32> to vector<8x8xbf16>
    %cst_173 = arith.constant dense<0.000000e+00> : vector<8x16xf32>
    %391 = tpu.matmul %390, %389, %cst_173 {dimension_numbers = #tpu.dot_dimension_numbers<[1], [0], [0], [1], [0, 0, 1, 1], [], []>} : vector<8x8xbf16>, vector<8x16xbf16>, vector<8x16xf32> -> vector<8x16xf32>
    %392 = arith.truncf %391 : vector<8x16xf32> to vector<8x16xbf16>
    %c1_174 = arith.constant 1 : index
    %c0_175 = arith.constant 0 : index
    %c32_176 = arith.constant 32 : index
    %393 = vector.load %arg11[%c1_174, %c0_175, %c32_176] : memref<2x8x64xbf16, #tpu.memory_space<vmem>>, vector<1x8x16xbf16>
    %394 = vector.shape_cast %393 : vector<1x8x16xbf16> to vector<8x16xbf16>
    %395 = vector.shape_cast %392 : vector<8x16xbf16> to vector<1x8x16xbf16>
    tpu.vector_store %arg11[%c1_174, %c0_175, %c32_176], %395 {strides = array<i32>} : memref<2x8x64xbf16, #tpu.memory_space<vmem>>, vector<1x8x16xbf16>,
    %c0_177 = arith.constant 0 : index
    %c3_178 = arith.constant 3 : index
    %396 = memref.load %arg6[%c0_177, %c3_178] : memref<4x4xf32, #tpu.memory_space<smem>>
    %397 = vector.broadcast %396 : f32 to vector<8x8xf32>
    %398 = arith.mulf %254, %397 : vector<8x8xf32>
    %c1_179 = arith.constant 1 : index
    %c3_180 = arith.constant 3 : index
    %399 = memref.load %arg6[%c1_179, %c3_180] : memref<4x4xf32, #tpu.memory_space<smem>>
    %400 = vector.broadcast %399 : f32 to vector<8x8xf32>
    %401 = arith.mulf %279, %400 : vector<8x8xf32>
    %402 = arith.addf %398, %401 : vector<8x8xf32>
    %c2_181 = arith.constant 2 : index
    %c3_182 = arith.constant 3 : index
    %403 = memref.load %arg6[%c2_181, %c3_182] : memref<4x4xf32, #tpu.memory_space<smem>>
    %404 = vector.broadcast %403 : f32 to vector<8x8xf32>
    %405 = arith.mulf %304, %404 : vector<8x8xf32>
    %406 = arith.addf %402, %405 : vector<8x8xf32>
    %c3_183 = arith.constant 3 : index
    %c3_184 = arith.constant 3 : index
    %407 = memref.load %arg6[%c3_183, %c3_184] : memref<4x4xf32, #tpu.memory_space<smem>>
    %408 = vector.broadcast %407 : f32 to vector<8x8xf32>
    %409 = arith.mulf %329, %408 : vector<8x8xf32>
    %410 = arith.addf %406, %409 : vector<8x8xf32>
    %411 = vector.extract_strided_slice %216 {offsets = [0, 48], sizes = [8, 16], strides = [1, 1]} : vector<8x64xbf16> to vector<8x16xbf16>
    %412 = arith.truncf %410 : vector<8x8xf32> to vector<8x8xbf16>
    %cst_185 = arith.constant dense<0.000000e+00> : vector<8x16xf32>
    %413 = tpu.matmul %412, %411, %cst_185 {dimension_numbers = #tpu.dot_dimension_numbers<[1], [0], [0], [1], [0, 0, 1, 1], [], []>} : vector<8x8xbf16>, vector<8x16xbf16>, vector<8x16xf32> -> vector<8x16xf32>
    %414 = arith.truncf %413 : vector<8x16xf32> to vector<8x16xbf16>
    %c1_186 = arith.constant 1 : index
    %c0_187 = arith.constant 0 : index
    %c48_188 = arith.constant 48 : index
    %415 = vector.load %arg11[%c1_186, %c0_187, %c48_188] : memref<2x8x64xbf16, #tpu.memory_space<vmem>>, vector<1x8x16xbf16>
    %416 = vector.shape_cast %415 : vector<1x8x16xbf16> to vector<8x16xbf16>
    %417 = vector.shape_cast %414 : vector<8x16xbf16> to vector<1x8x16xbf16>
    tpu.vector_store %arg11[%c1_186, %c0_187, %c48_188], %417 {strides = array<i32>} : memref<2x8x64xbf16, #tpu.memory_space<vmem>>, vector<1x8x16xbf16>,
    %c0_189 = arith.constant 0 : index
    %c0_190 = arith.constant 0 : index
    %c0_191 = arith.constant 0 : index
    %418 = vector.load %arg11[%c0_189, %c0_190, %c0_191] : memref<2x8x64xbf16, #tpu.memory_space<vmem>>, vector<2x8x64xbf16>
    %419 = vector.shape_cast %418 : vector<2x8x64xbf16> to vector<16x64xbf16>
    %c0_192 = arith.constant 0 : index
    %c0_193 = arith.constant 0 : index
    %420 = vector.load %arg7[%c0_192, %c0_193] : memref<64x32xbf16, #tpu.memory_space<vmem>>, vector<64x32xbf16>
    %cst_194 = arith.constant dense<0.000000e+00> : vector<16x32xf32>
    %421 = tpu.matmul %419, %420, %cst_194 {dimension_numbers = #tpu.dot_dimension_numbers<[1], [0], [0], [1], [0, 0, 1, 1], [], []>} : vector<16x64xbf16>, vector<64x32xbf16>, vector<16x32xf32> -> vector<16x32xf32>
    %c0_195 = arith.constant 0 : index
    %c0_196 = arith.constant 0 : index
    %422 = vector.load %arg8[%c0_195, %c0_196] : memref<1x32xf32, #tpu.memory_space<vmem>>, vector<1x32xf32>
    %423 = vector.broadcast %422 : vector<1x32xf32> to vector<16x32xf32>
    %424 = arith.addf %421, %423 : vector<16x32xf32>
    %425 = vector.shape_cast %424 : vector<16x32xf32> to vector<2x8x32xf32>
    %c0_197 = arith.constant 0 : index
    %c0_198 = arith.constant 0 : index
    %c0_199 = arith.constant 0 : index
    %426 = vector.load %arg9[%c0_197, %c0_198, %c0_199] : memref<2x8x32xf32, #tpu.memory_space<vmem>>, vector<2x8x32xf32>
    tpu.vector_store %arg9[%c0_197, %c0_198, %c0_199], %425 {strides = array<i32>} : memref<2x8x32xf32, #tpu.memory_space<vmem>>, vector<2x8x32xf32>,
    return
  }
  func.func @transform_0(%arg0: i32, %arg1: i32) -> (i32, i32, i32) {
    %c0_i32 = arith.constant 0 : i32
    %c0_i32_0 = arith.constant 0 : i32
    %c0_i32_1 = arith.constant 0 : i32
    return %arg0, %c0_i32, %c0_i32_0 : i32, i32, i32
  }
  func.func @transform_1(%arg0: i32, %arg1: i32) -> (i32, i32) {
    %c0_i32 = arith.constant 0 : i32
    %c0_i32_0 = arith.constant 0 : i32
    %c0_i32_1 = arith.constant 0 : i32
    return %c0_i32, %c0_i32_0 : i32, i32
  }
  func.func @transform_2(%arg0: i32, %arg1: i32) -> (i32, i32) {
    %c0_i32 = arith.constant 0 : i32
    %c0_i32_0 = arith.constant 0 : i32
    %c0_i32_1 = arith.constant 0 : i32
    return %c0_i32, %c0_i32_0 : i32, i32
  }
  func.func @transform_3(%arg0: i32, %arg1: i32) -> (i32, i32) {
    %c0_i32 = arith.constant 0 : i32
    %c0_i32_0 = arith.constant 0 : i32
    %c0_i32_1 = arith.constant 0 : i32
    return %c0_i32, %c0_i32_0 : i32, i32
  }
  func.func @transform_4(%arg0: i32, %arg1: i32) -> (i32, i32) {
    %c0_i32 = arith.constant 0 : i32
    %c0_i32_0 = arith.constant 0 : i32
    %c0_i32_1 = arith.constant 0 : i32
    return %c0_i32, %c0_i32_0 : i32, i32
  }
  func.func @transform_5(%arg0: i32, %arg1: i32) -> (i32, i32) {
    %c0_i32 = arith.constant 0 : i32
    %c0_i32_0 = arith.constant 0 : i32
    %c0_i32_1 = arith.constant 0 : i32
    return %c0_i32, %c0_i32_0 : i32, i32
  }
  func.func @transform_6(%arg0: i32, %arg1: i32) -> (i32, i32) {
    %c0_i32 = arith.constant 0 : i32
    %c0_i32_0 = arith.constant 0 : i32
    %c0_i32_1 = arith.constant 0 : i32
    return %c0_i32, %c0_i32_0 : i32, i32
  }
  func.func @transform_7(%arg0: i32, %arg1: i32) -> (i32, i32, i32) {
    %c0_i32 = arith.constant 0 : i32
    %c0_i32_0 = arith.constant 0 : i32
    return %arg0, %arg1, %c0_i32 : i32, i32, i32
  }
}

</mosaic_0001>

<llo_original>
// kernel: tpu_custom_call.1
$region0: #{tpu_custom_call.1}
  #allocation0 [shape = 'u32[]', space=smem, size = 0x4, offset = 0x4, fixed_abs, tag = 'smem constant byte address 0x4 - core index']
  #allocation1 [shape = 'u32[144,128]{1,0:T(1,128)}', space=vmem, size = 0x12000, scoped, tag = 'internal scratch']
  #allocation2 [shape = 'bf16[2,8,128]{2,1,0:T(8,128)(2,1)}', space=vmem, size = 0x1000, scoped, tag = 'scratch operand']
  #allocation3 [shape = 'bf16[2,8,64]{2,1,0:T(8,128)(2,1)}', space=vmem, size = 0x1000, scoped, tag = 'scratch operand']
  %s0 = inlined_call_operand.vmem [shape: bf16[2,8,32], index: 0, kind: input, shape index: {}]
  %s1 = inlined_call_operand.vmem [shape: bf16[32,64], index: 1, kind: input, shape index: {}]
  %s2 = inlined_call_operand.vmem [shape: bf16[32,128], index: 2, kind: input, shape index: {}]
  %s3 = inlined_call_operand.vmem [shape: f32[4,4], index: 3, kind: input, shape index: {}]
  %s4 = inlined_call_operand.vmem [shape: f32[4,4], index: 4, kind: input, shape index: {}]
  %s5 = inlined_call_operand.vmem [shape: bf16[64,32], index: 5, kind: input, shape index: {}]
  %s6 = inlined_call_operand.vmem [shape: f32[1,32], index: 6, kind: input, shape index: {}]
  %s7 = inlined_call_operand.hbm [shape: f32[2,8,32], index: 7, kind: output, shape index: {}]
  %s8 = sld [smem:[#allocation0]]
  $region50: #{tpu_custom_call.1} parent=0
    _
  %s10 = ssub.s32 1, %s8
  %s11 = scalar_select 0, %s10, %s8
  $region1: #{tpu_custom_call.1} parent=0
    #allocation4 [shape = 'u8[2048]{0}', space=smem, size = 0x800, scoped, tag = 'input window, operand 3, single buffered']
    #allocation5 [shape = 's32[1]{0}', space=sflag, size = 0x4, scoped, tag = 'scoped memory for tpu_custom_call.1']
    #allocation6 [shape = 's32[1]{0}', space=sflag, size = 0x4, scoped, tag = 'scoped memory for tpu_custom_call.1']
    #allocation7 [shape = 'u8[2048]{0}', space=smem, size = 0x800, scoped, tag = 'input window, operand 4, single buffered']
    #allocation8 [shape = 's32[1]{0}', space=sflag, size = 0x4, scoped, tag = 'scoped memory for tpu_custom_call.1']
    #allocation9 [shape = 'u8[8192]{0}', space=vmem, size = 0x2000, scoped, tag = 'output window, operand 0, single buffered']
    %12 = vsyncpa [#allocation6], 0
    %13 = vsyncpa [#allocation8], 0
    %14 = vsyncpa [#allocation5], 0
    // Predicated region
    $region2: #{tpu_custom_call.1} parent=1 // pred_check
      _
    $region3: #{tpu_custom_call.1} parent=1 // pred_check_branch
      %16 = sbr.rel (0) target = $region5
    $region4: #{tpu_custom_call.1} parent=1 // pred_region
      _
    $region5: #{tpu_custom_call.1} parent=1 // pred_fallthru
      _
    // Predicated region
    $region6: #{tpu_custom_call.1} parent=1 // pred_check
      _
    $region7: #{tpu_custom_call.1} parent=1 // pred_check_branch
      %18 = sbr.rel (0) target = $region9
    $region8: #{tpu_custom_call.1} parent=1 // pred_region
      _
    $region9: #{tpu_custom_call.1} parent=1 // pred_fallthru
      _
    // Predicated region
    $region10: #{tpu_custom_call.1} parent=1 // pred_check
      _
    $region11: #{tpu_custom_call.1} parent=1 // pred_check_branch
      %20 = sbr.rel (0) target = $region13
    $region12: #{tpu_custom_call.1} parent=1 // pred_region
      _
    $region13: #{tpu_custom_call.1} parent=1 // pred_fallthru
      _
    // Predicated region
    $region14: #{tpu_custom_call.1} parent=1 // pred_check
      _
    $region15: #{tpu_custom_call.1} parent=1 // pred_check_branch
      %22 = sbr.rel (0) target = $region17
    $region16: #{tpu_custom_call.1} parent=1 // pred_region
      %s24 = ssub.s32 64, 64
      %25 = vsyncadd [#allocation6], %s24
      %s27 = sshll.u32 %s3, 4
      %s28 = int_to_ptr.vmem [resolvable:$true] %s27
      %30 = dma.vmem_to_smem %s28, 64, [#allocation4], [#allocation6]
    $region17: #{tpu_custom_call.1} parent=1 // pred_fallthru
      _
    // Predicated region
    $region18: #{tpu_custom_call.1} parent=1 // pred_check
      _
    $region19: #{tpu_custom_call.1} parent=1 // pred_check_branch
      %32 = sbr.rel (0) target = $region21
    $region20: #{tpu_custom_call.1} parent=1 // pred_region
      %s34 = ssub.s32 64, 64
      %35 = vsyncadd [#allocation8], %s34
      %s37 = sshll.u32 %s4, 4
      %s38 = int_to_ptr.vmem [resolvable:$true] %s37
      %40 = dma.vmem_to_smem %s38, 64, [#allocation7], [#allocation8]
    $region21: #{tpu_custom_call.1} parent=1 // pred_fallthru
      _
    // Predicated region
    $region22: #{tpu_custom_call.1} parent=1 // pred_check
      _
    $region23: #{tpu_custom_call.1} parent=1 // pred_check_branch
      %42 = sbr.rel (0) target = $region25
    $region24: #{tpu_custom_call.1} parent=1 // pred_region
      _
    $region25: #{tpu_custom_call.1} parent=1 // pred_fallthru
      _
    // Predicated region
    $region26: #{tpu_custom_call.1} parent=1 // pred_check
      _
    $region27: #{tpu_custom_call.1} parent=1 // pred_check_branch
      %44 = sbr.rel (0) target = $region29
    $region28: #{tpu_custom_call.1} parent=1 // pred_region
      _
    $region29: #{tpu_custom_call.1} parent=1 // pred_fallthru
      _
    // Predicated region
    $region30: #{tpu_custom_call.1} parent=1 // pred_check
      _
    $region31: #{tpu_custom_call.1} parent=1 // pred_check_branch
      %46 = sbr.rel (0) target = $region33
    $region32: #{tpu_custom_call.1} parent=1 // pred_region
      %47 = dma.done [#allocation6], 64
    $region33: #{tpu_custom_call.1} parent=1 // pred_fallthru
      _
    // Predicated region
    $region34: #{tpu_custom_call.1} parent=1 // pred_check
      _
    $region35: #{tpu_custom_call.1} parent=1 // pred_check_branch
      %49 = sbr.rel (0) target = $region37
    $region36: #{tpu_custom_call.1} parent=1 // pred_region
      %50 = dma.done [#allocation8], 64
    $region37: #{tpu_custom_call.1} parent=1 // pred_fallthru
      _
    %51 = sfence
    %p53 = scmp.eq.s32.totalorder 0, 0
    // Predicated region
    $region38: #{tpu_custom_call.1} parent=1 // pred_check
      %p54 = pneg %p53
    $region39: #{tpu_custom_call.1} parent=1 // pred_check_branch
      %56 = sbr.rel (%p54) target = $region41
    $region40: #{tpu_custom_call.1} parent=1 // pred_region
      %v57 = vld [vmem:[%s0] sm:$0xf]
      %v58 = vld [vmem:[%s0 + $0x4] sm:$0xf]
      %v59 = vld [vmem:[%s2] sm:$0xf]
      %v60 = vld [vmem:[%s2 + $0x4] sm:$0xf]
      %v61 = vld [vmem:[%s2 + $0x8] sm:$0xf]
      %v62 = vld [vmem:[%s2 + $0xc] sm:$0xf]
      %v65 = vunpack.c.l.b16 %v57
      %v66 = vunpack.c.l.b16 %v58
      %v67 = vpack.c.b16 %v66, %v65
      %v72 = vunpack.c.l.b16 %v59
      %v73 = vunpack.c.l.b16 %v60
      %v74 = vunpack.c.l.b16 %v61
      %v75 = vunpack.c.l.b16 %v62
      %v76 = vpack.c.b16 %v73, %v72
      %v77 = vpack.c.b16 %v75, %v74
      %vm80 = vcmask 261120
      %v82 = vsel %vm80, %v67, 0
      %84 = vmatprep.subr.bf16.mxu0 0
      %85 = vmatpush1.bf16.msra.mxu0 %v76
      %86 = vmatprep.subr.bf16.mxu0 0
      %87 = vmatpush1.bf16.msra.mxu0 %v77
      %88 = vmatprep.subr.bf16.mxu0 0
      %89 = vmatpush1.bf16.msra.mxu0 0
      %90 = vmatprep.subr.bf16.mxu0 0
      %91 = vmatpush1.bf16.msra.mxu0 0
      %92 = vmatprep.subr.bf16.mxu0 0
      %93 = vmatpush1.bf16.msra.mxu0 0
      %94 = vmatprep.subr.bf16.mxu0 0
      %95 = vmatpush1.bf16.msra.mxu0 0
      %96 = vmatprep.subr.bf16.mxu0 0
      %97 = vmatpush1.bf16.msra.mxu0 0
      %98 = vmatprep.subr.bf16.mxu0 0
      %99 = vmatpush1.bf16.msra.mxu0 0
      %100 = vmatprep.subr.bf16.mxu0 0
      %101 = vmatpush1.bf16.msra.mxu0 0
      %102 = vmatprep.subr.bf16.mxu0 0
      %103 = vmatpush1.bf16.msra.mxu0 0
      %104 = vmatprep.subr.bf16.mxu0 0
      %105 = vmatpush1.bf16.msra.mxu0 0
      %106 = vmatprep.subr.bf16.mxu0 0
      %107 = vmatpush1.bf16.msra.mxu0 0
      %108 = vmatprep.subr.bf16.mxu0 0
      %109 = vmatpush1.bf16.msra.mxu0 0
      %110 = vmatprep.subr.bf16.mxu0 0
      %111 = vmatpush1.bf16.msra.mxu0 0
      %112 = vmatprep.subr.bf16.mxu0 0
      %113 = vmatpush1.bf16.msra.mxu0 0
      %114 = vmatprep.subr.bf16.mxu0 0
      %115 = vmatpush1.bf16.msra.mxu0 0
      %116 = vmatprep.mubr.bf16.mxu0 0
      %117 = vmatmul.mubr.bf16.gmra.mrb[0].mxu0 %v82
      %v118 = vpop.f32.mrb[0].mxu0
      %v119 = vadd.f32 0.0, %v118
      %v120 = vpop.f32.mrb[0].mxu0
      %v121 = vpop.f32.mrb[0].mxu0
      %v122 = vadd.f32 0.0, %v121
      %v123 = vpop.f32.mrb[0].mxu0
      %124 = vdwg.mxu0
      %v125 = vpack.c.bf16 %v119, %v119
      %v126 = vpack.c.bf16 %v122, %v122
      %127 = vst [vmem:[#allocation2] sm:$0xf] %v125
      %128 = vst [vmem:[#allocation2 + $0x4] sm:$0xf] %v126
    $region41: #{tpu_custom_call.1} parent=1 // pred_fallthru
      _
    %v129 = vld [vmem:[%s0] sm:$0xf]
    %v130 = vld [vmem:[%s0 + $0x4] sm:$0xf]
    %v131 = vld [vmem:[%s1] sm:$0xf]
    %v132 = vld [vmem:[%s1 + $0x4] sm:$0xf]
    %v133 = vld [vmem:[%s1 + $0x8] sm:$0xf]
    %v134 = vld [vmem:[%s1 + $0xc] sm:$0xf]
    %v137 = vunpack.c.l.b16 %v129
    %v138 = vunpack.c.l.b16 %v130
    %v139 = vpack.c.b16 %v138, %v137
    %v144 = vunpack.c.l.b16 %v131
    %v145 = vunpack.c.l.b16 %v132
    %v146 = vunpack.c.l.b16 %v133
    %v147 = vunpack.c.l.b16 %v134
    %v148 = vpack.c.b16 %v145, %v144
    %v149 = vpack.c.b16 %v147, %v146
    %vm152 = vcmask 261120
    %v154 = vsel %vm152, %v139, 0
    %156 = vmatprep.subr.bf16.mxu0 0
    %157 = vmatpush1.bf16.msra.mxu0 %v148
    %158 = vmatprep.subr.bf16.mxu0 0
    %159 = vmatpush1.bf16.msra.mxu0 %v149
    %160 = vmatprep.subr.bf16.mxu0 0
    %161 = vmatpush1.bf16.msra.mxu0 0
    %162 = vmatprep.subr.bf16.mxu0 0
    %163 = vmatpush1.bf16.msra.mxu0 0
    %164 = vmatprep.subr.bf16.mxu0 0
    %165 = vmatpush1.bf16.msra.mxu0 0
    %166 = vmatprep.subr.bf16.mxu0 0
    %167 = vmatpush1.bf16.msra.mxu0 0
    %168 = vmatprep.subr.bf16.mxu0 0
    %169 = vmatpush1.bf16.msra.mxu0 0
    %170 = vmatprep.subr.bf16.mxu0 0
    %171 = vmatpush1.bf16.msra.mxu0 0
    %172 = vmatprep.subr.bf16.mxu0 0
    %173 = vmatpush1.bf16.msra.mxu0 0
    %174 = vmatprep.subr.bf16.mxu0 0
    %175 = vmatpush1.bf16.msra.mxu0 0
    %176 = vmatprep.subr.bf16.mxu0 0
    %177 = vmatpush1.bf16.msra.mxu0 0
    %178 = vmatprep.subr.bf16.mxu0 0
    %179 = vmatpush1.bf16.msra.mxu0 0
    %180 = vmatprep.subr.bf16.mxu0 0
    %181 = vmatpush1.bf16.msra.mxu0 0
    %182 = vmatprep.subr.bf16.mxu0 0
    %183 = vmatpush1.bf16.msra.mxu0 0
    %184 = vmatprep.subr.bf16.mxu0 0
    %185 = vmatpush1.bf16.msra.mxu0 0
    %186 = vmatprep.subr.bf16.mxu0 0
    %187 = vmatpush1.bf16.msra.mxu0 0
    %188 = vmatprep.mubr.bf16.mxu0 0
    %189 = vmatmul.mubr.bf16.gmra.mrb[0].mxu0 %v154
    %v190 = vpop.f32.mrb[0].mxu0
    %v191 = vadd.f32 0.0, %v190
    %v192 = vpop.f32.mrb[0].mxu0
    %v193 = vpop.f32.mrb[0].mxu0
    %v194 = vadd.f32 0.0, %v193
    %v195 = vpop.f32.mrb[0].mxu0
    %196 = vdwg.mxu0
    %v197 = vpack.c.bf16 %v194, %v191
    %v198 = vld [vmem:[#allocation2] sm:$0xf]
    %vm199 = vcmask 130048
    %v201 = vsel %vm199, %v197, 0
    %v204 = vsel %vm199, %v198, 0
    %206 = vmatprep.subr.bf16.mxu0 0
    %207 = vmatpush1.bf16.xpose.msra.mxu0 %v204
    %208 = vmatprep.subr.bf16.mxu0 0
    %209 = vmatpush1.bf16.xpose.msra.mxu0 0
    %210 = vmatprep.subr.bf16.mxu0 0
    %211 = vmatpush1.bf16.xpose.msra.mxu0 0
    %212 = vmatprep.subr.bf16.mxu0 0
    %213 = vmatpush1.bf16.xpose.msra.mxu0 0
    %214 = vmatprep.subr.bf16.mxu0 0
    %215 = vmatpush1.bf16.xpose.msra.mxu0 0
    %216 = vmatprep.subr.bf16.mxu0 0
    %217 = vmatpush1.bf16.xpose.msra.mxu0 0
    %218 = vmatprep.subr.bf16.mxu0 0
    %219 = vmatpush1.bf16.xpose.msra.mxu0 0
    %220 = vmatprep.subr.bf16.mxu0 0
    %221 = vmatpush1.bf16.xpose.msra.mxu0 0
    %222 = vmatprep.subr.bf16.mxu0 0
    %223 = vmatpush1.bf16.xpose.msra.mxu0 0
    %224 = vmatprep.subr.bf16.mxu0 0
    %225 = vmatpush1.bf16.xpose.msra.mxu0 0
    %226 = vmatprep.subr.bf16.mxu0 0
    %227 = vmatpush1.bf16.xpose.msra.mxu0 0
    %228 = vmatprep.subr.bf16.mxu0 0
    %229 = vmatpush1.bf16.xpose.msra.mxu0 0
    %230 = vmatprep.subr.bf16.mxu0 0
    %231 = vmatpush1.bf16.xpose.msra.mxu0 0
    %232 = vmatprep.subr.bf16.mxu0 0
    %233 = vmatpush1.bf16.xpose.msra.mxu0 0
    %234 = vmatprep.subr.bf16.mxu0 0
    %235 = vmatpush1.bf16.xpose.msra.mxu0 0
    %236 = vmatprep.subr.bf16.mxu0 0
    %237 = vmatpush1.bf16.xpose.msra.mxu0 0
    %238 = vmatprep.mubr.bf16.mxu0 0
    %239 = vmatmul.mubr.bf16.gmra.mrb[0].mxu0 %v201
    %v240 = vpop.f32.mrb[0].mxu0
    %v241 = vadd.f32 0.0, %v240
    %v242 = vpop.f32.mrb[0].mxu0
    %v243 = vpop.f32.mrb[0].mxu0
    %v244 = vpop.f32.mrb[0].mxu0
    %245 = vdwg.mxu0
    %247 = vrot.lane.b32.xlu0 %v197, 112
    %v248 = vpop.permute.xlu0 %247
    %v250 = vunpack.c.l.b16 %v198
    %v251 = vpack.c.b16 %v250, %v250
    %252 = vrot.lane.b32.xlu0 %v251, 112
    %v253 = vpop.permute.xlu0 %252
    %v255 = vsel %vm199, %v248, 0
    %v258 = vsel %vm199, %v253, 0
    %260 = vmatprep.subr.bf16.mxu0 0
    %261 = vmatpush1.bf16.xpose.msra.mxu0 %v258
    %262 = vmatprep.subr.bf16.mxu0 0
    %263 = vmatpush1.bf16.xpose.msra.mxu0 0
    %264 = vmatprep.subr.bf16.mxu0 0
    %265 = vmatpush1.bf16.xpose.msra.mxu0 0
    %266 = vmatprep.subr.bf16.mxu0 0
    %267 = vmatpush1.bf16.xpose.msra.mxu0 0
    %268 = vmatprep.subr.bf16.mxu0 0
    %269 = vmatpush1.bf16.xpose.msra.mxu0 0
    %270 = vmatprep.subr.bf16.mxu0 0
    %271 = vmatpush1.bf16.xpose.msra.mxu0 0
    %272 = vmatprep.subr.bf16.mxu0 0
    %273 = vmatpush1.bf16.xpose.msra.mxu0 0
    %274 = vmatprep.subr.bf16.mxu0 0
    %275 = vmatpush1.bf16.xpose.msra.mxu0 0
    %276 = vmatprep.subr.bf16.mxu0 0
    %277 = vmatpush1.bf16.xpose.msra.mxu0 0
    %278 = vmatprep.subr.bf16.mxu0 0
    %279 = vmatpush1.bf16.xpose.msra.mxu0 0
    %280 = vmatprep.subr.bf16.mxu0 0
    %281 = vmatpush1.bf16.xpose.msra.mxu0 0
    %282 = vmatprep.subr.bf16.mxu0 0
    %283 = vmatpush1.bf16.xpose.msra.mxu0 0
    %284 = vmatprep.subr.bf16.mxu0 0
    %285 = vmatpush1.bf16.xpose.msra.mxu0 0
    %286 = vmatprep.subr.bf16.mxu0 0
    %287 = vmatpush1.bf16.xpose.msra.mxu0 0
    %288 = vmatprep.subr.bf16.mxu0 0
    %289 = vmatpush1.bf16.xpose.msra.mxu0 0
    %290 = vmatprep.subr.bf16.mxu0 0
    %291 = vmatpush1.bf16.xpose.msra.mxu0 0
    %292 = vmatprep.mubr.bf16.mxu0 0
    %293 = vmatmul.mubr.bf16.gmra.mrb[0].mxu0 %v255
    %v294 = vpop.f32.mrb[0].mxu0
    %v295 = vadd.f32 0.0, %v294
    %v296 = vpop.f32.mrb[0].mxu0
    %v297 = vpop.f32.mrb[0].mxu0
    %v298 = vpop.f32.mrb[0].mxu0
    %299 = vdwg.mxu0
    %300 = vrot.lane.b32.xlu0 %v197, 96
    %v301 = vpop.permute.xlu0 %300
    %302 = vrot.lane.b32.xlu0 %v251, 96
    %v303 = vpop.permute.xlu0 %302
    %v305 = vsel %vm199, %v301, 0
    %v308 = vsel %vm199, %v303, 0
    %310 = vmatprep.subr.bf16.mxu0 0
    %311 = vmatpush1.bf16.xpose.msra.mxu0 %v308
    %312 = vmatprep.subr.bf16.mxu0 0
    %313 = vmatpush1.bf16.xpose.msra.mxu0 0
    %314 = vmatprep.subr.bf16.mxu0 0
    %315 = vmatpush1.bf16.xpose.msra.mxu0 0
    %316 = vmatprep.subr.bf16.mxu0 0
    %317 = vmatpush1.bf16.xpose.msra.mxu0 0
    %318 = vmatprep.subr.bf16.mxu0 0
    %319 = vmatpush1.bf16.xpose.msra.mxu0 0
    %320 = vmatprep.subr.bf16.mxu0 0
    %321 = vmatpush1.bf16.xpose.msra.mxu0 0
    %322 = vmatprep.subr.bf16.mxu0 0
    %323 = vmatpush1.bf16.xpose.msra.mxu0 0
    %324 = vmatprep.subr.bf16.mxu0 0
    %325 = vmatpush1.bf16.xpose.msra.mxu0 0
    %326 = vmatprep.subr.bf16.mxu0 0
    %327 = vmatpush1.bf16.xpose.msra.mxu0 0
    %328 = vmatprep.subr.bf16.mxu0 0
    %329 = vmatpush1.bf16.xpose.msra.mxu0 0
    %330 = vmatprep.subr.bf16.mxu0 0
    %331 = vmatpush1.bf16.xpose.msra.mxu0 0
    %332 = vmatprep.subr.bf16.mxu0 0
    %333 = vmatpush1.bf16.xpose.msra.mxu0 0
    %334 = vmatprep.subr.bf16.mxu0 0
    %335 = vmatpush1.bf16.xpose.msra.mxu0 0
    %336 = vmatprep.subr.bf16.mxu0 0
    %337 = vmatpush1.bf16.xpose.msra.mxu0 0
    %338 = vmatprep.subr.bf16.mxu0 0
    %339 = vmatpush1.bf16.xpose.msra.mxu0 0
    %340 = vmatprep.subr.bf16.mxu0 0
    %341 = vmatpush1.bf16.xpose.msra.mxu0 0
    %342 = vmatprep.mubr.bf16.mxu0 0
    %343 = vmatmul.mubr.bf16.gmra.mrb[0].mxu0 %v305
    %v344 = vpop.f32.mrb[0].mxu0
    %v345 = vadd.f32 0.0, %v344
    %v346 = vpop.f32.mrb[0].mxu0
    %v347 = vpop.f32.mrb[0].mxu0
    %v348 = vpop.f32.mrb[0].mxu0
    %349 = vdwg.mxu0
    %350 = vrot.lane.b32.xlu0 %v197, 80
    %v351 = vpop.permute.xlu0 %350
    %352 = vrot.lane.b32.xlu0 %v251, 80
    %v353 = vpop.permute.xlu0 %352
    %v355 = vsel %vm199, %v351, 0
    %v358 = vsel %vm199, %v353, 0
    %360 = vmatprep.subr.bf16.mxu0 0
    %361 = vmatpush1.bf16.xpose.msra.mxu0 %v358
    %362 = vmatprep.subr.bf16.mxu0 0
    %363 = vmatpush1.bf16.xpose.msra.mxu0 0
    %364 = vmatprep.subr.bf16.mxu0 0
    %365 = vmatpush1.bf16.xpose.msra.mxu0 0
    %366 = vmatprep.subr.bf16.mxu0 0
    %367 = vmatpush1.bf16.xpose.msra.mxu0 0
    %368 = vmatprep.subr.bf16.mxu0 0
    %369 = vmatpush1.bf16.xpose.msra.mxu0 0
    %370 = vmatprep.subr.bf16.mxu0 0
    %371 = vmatpush1.bf16.xpose.msra.mxu0 0
    %372 = vmatprep.subr.bf16.mxu0 0
    %373 = vmatpush1.bf16.xpose.msra.mxu0 0
    %374 = vmatprep.subr.bf16.mxu0 0
    %375 = vmatpush1.bf16.xpose.msra.mxu0 0
    %376 = vmatprep.subr.bf16.mxu0 0
    %377 = vmatpush1.bf16.xpose.msra.mxu0 0
    %378 = vmatprep.subr.bf16.mxu0 0
    %379 = vmatpush1.bf16.xpose.msra.mxu0 0
    %380 = vmatprep.subr.bf16.mxu0 0
    %381 = vmatpush1.bf16.xpose.msra.mxu0 0
    %382 = vmatprep.subr.bf16.mxu0 0
    %383 = vmatpush1.bf16.xpose.msra.mxu0 0
    %384 = vmatprep.subr.bf16.mxu0 0
    %385 = vmatpush1.bf16.xpose.msra.mxu0 0
    %386 = vmatprep.subr.bf16.mxu0 0
    %387 = vmatpush1.bf16.xpose.msra.mxu0 0
    %388 = vmatprep.subr.bf16.mxu0 0
    %389 = vmatpush1.bf16.xpose.msra.mxu0 0
    %390 = vmatprep.subr.bf16.mxu0 0
    %391 = vmatpush1.bf16.xpose.msra.mxu0 0
    %392 = vmatprep.mubr.bf16.mxu0 0
    %393 = vmatmul.mubr.bf16.gmra.mrb[0].mxu0 %v355
    %v394 = vpop.f32.mrb[0].mxu0
    %v395 = vadd.f32 0.0, %v394
    %v396 = vpop.f32.mrb[0].mxu0
    %v397 = vpop.f32.mrb[0].mxu0
    %v398 = vpop.f32.mrb[0].mxu0
    %399 = vdwg.mxu0
    %s400 = sld [smem:[#allocation4]]
    %v401 = vstv %s400
    %v402 = vmul.f32 %v241, %v401
    %s403 = sld [smem:[#allocation4 + $0x80]]
    %v404 = vstv %s403
    %v405 = vmul.f32 %v295, %v404
    %v406 = vadd.f32 %v402, %v405
    %s407 = sld [smem:[#allocation4 + $0x100]]
    %v408 = vstv %s407
    %v409 = vmul.f32 %v345, %v408
    %v410 = vadd.f32 %v406, %v409
    %s411 = sld [smem:[#allocation4 + $0x180]]
    %v412 = vstv %s411
    %v413 = vmul.f32 %v395, %v412
    %v414 = vadd.f32 %v410, %v413
    %vm415 = vcmask 64512
    %v416 = vsel %vm415, %v414, -inf
    %417 = vmax.xlane.f32.xlu0 %v416
    %v418 = vpop.xlane.xlu0 %417
    %v419 = vsub.f32 %v414, %v418
    %v420 = vmul.f32 %v419, 1.442695
    %v421 = vpow.pop %v420
    %v422 = vsel %vm415, %v421, 0.0
    %423 = vadd.xlane.f32.xlu0 %v422
    %v424 = vpop.xlane.xlu0 %423
    %v425 = vrcp.pop %v424
    %v426 = vmul.f32 %v421, %v425
    %s427 = sld [smem:[#allocation4 + $0x1]]
    %v428 = vstv %s427
    %v429 = vmul.f32 %v241, %v428
    %s430 = sld [smem:[#allocation4 + $0x81]]
    %v431 = vstv %s430
    %v432 = vmul.f32 %v295, %v431
    %v433 = vadd.f32 %v429, %v432
    %s434 = sld [smem:[#allocation4 + $0x101]]
    %v435 = vstv %s434
    %v436 = vmul.f32 %v345, %v435
    %v437 = vadd.f32 %v433, %v436
    %s438 = sld [smem:[#allocation4 + $0x181]]
    %v439 = vstv %s438
    %v440 = vmul.f32 %v395, %v439
    %v441 = vadd.f32 %v437, %v440
    %v442 = vsel %vm415, %v441, -inf
    %443 = vmax.xlane.f32.xlu0 %v442
    %v444 = vpop.xlane.xlu0 %443
    %v445 = vsub.f32 %v441, %v444
    %v446 = vmul.f32 %v445, 1.442695
    %v447 = vpow.pop %v446
    %v448 = vsel %vm415, %v447, 0.0
    %449 = vadd.xlane.f32.xlu0 %v448
    %v450 = vpop.xlane.xlu0 %449
    %v451 = vrcp.pop %v450
    %v452 = vmul.f32 %v447, %v451
    %s453 = sld [smem:[#allocation4 + $0x2]]
    %v454 = vstv %s453
    %v455 = vmul.f32 %v241, %v454
    %s456 = sld [smem:[#allocation4 + $0x82]]
    %v457 = vstv %s456
    %v458 = vmul.f32 %v295, %v457
    %v459 = vadd.f32 %v455, %v458
    %s460 = sld [smem:[#allocation4 + $0x102]]
    %v461 = vstv %s460
    %v462 = vmul.f32 %v345, %v461
    %v463 = vadd.f32 %v459, %v462
    %s464 = sld [smem:[#allocation4 + $0x182]]
    %v465 = vstv %s464
    %v466 = vmul.f32 %v395, %v465
    %v467 = vadd.f32 %v463, %v466
    %v468 = vsel %vm415, %v467, -inf
    %469 = vmax.xlane.f32.xlu0 %v468
    %v470 = vpop.xlane.xlu0 %469
    %v471 = vsub.f32 %v467, %v470
    %v472 = vmul.f32 %v471, 1.442695
    %v473 = vpow.pop %v472
    %v474 = vsel %vm415, %v473, 0.0
    %475 = vadd.xlane.f32.xlu0 %v474
    %v476 = vpop.xlane.xlu0 %475
    %v477 = vrcp.pop %v476
    %v478 = vmul.f32 %v473, %v477
    %s479 = sld [smem:[#allocation4 + $0x3]]
    %v480 = vstv %s479
    %v481 = vmul.f32 %v241, %v480
    %s482 = sld [smem:[#allocation4 + $0x83]]
    %v483 = vstv %s482
    %v484 = vmul.f32 %v295, %v483
    %v485 = vadd.f32 %v481, %v484
    %s486 = sld [smem:[#allocation4 + $0x103]]
    %v487 = vstv %s486
    %v488 = vmul.f32 %v345, %v487
    %v489 = vadd.f32 %v485, %v488
    %s490 = sld [smem:[#allocation4 + $0x183]]
    %v491 = vstv %s490
    %v492 = vmul.f32 %v395, %v491
    %v493 = vadd.f32 %v489, %v492
    %v494 = vsel %vm415, %v493, -inf
    %495 = vmax.xlane.f32.xlu0 %v494
    %v496 = vpop.xlane.xlu0 %495
    %v497 = vsub.f32 %v493, %v496
    %v498 = vmul.f32 %v497, 1.442695
    %v499 = vpow.pop %v498
    %v500 = vsel %vm415, %v499, 0.0
    %501 = vadd.xlane.f32.xlu0 %v500
    %v502 = vpop.xlane.xlu0 %501
    %v503 = vrcp.pop %v502
    %v504 = vmul.f32 %v499, %v503
    %s505 = sld [smem:[#allocation7]]
    %v506 = vstv %s505
    %v507 = vmul.f32 %v426, %v506
    %s508 = sld [smem:[#allocation7 + $0x80]]
    %v509 = vstv %s508
    %v510 = vmul.f32 %v452, %v509
    %v511 = vadd.f32 %v507, %v510
    %s512 = sld [smem:[#allocation7 + $0x100]]
    %v513 = vstv %s512
    %v514 = vmul.f32 %v478, %v513
    %v515 = vadd.f32 %v511, %v514
    %s516 = sld [smem:[#allocation7 + $0x180]]
    %v517 = vstv %s516
    %v518 = vmul.f32 %v504, %v517
    %v519 = vadd.f32 %v515, %v518
    %v520 = vpack.c.bf16 %v519, %v519
    %521 = vrot.lane.b32.xlu0 %v251, 64
    %v522 = vpop.permute.xlu0 %521
    %v524 = vsel %vm415, %v520, 0
    %vm526 = vcmask 1043456
    %v528 = vsel %vm526, %v522, 0
    %530 = vmatprep.subr.bf16.mxu0 0
    %531 = vmatpush1.bf16.msra.mxu0 %v528
    %532 = vmatprep.subr.bf16.mxu0 0
    %533 = vmatpush1.bf16.msra.mxu0 0
    %534 = vmatprep.subr.bf16.mxu0 0
    %535 = vmatpush1.bf16.msra.mxu0 0
    %536 = vmatprep.subr.bf16.mxu0 0
    %537 = vmatpush1.bf16.msra.mxu0 0
    %538 = vmatprep.subr.bf16.mxu0 0
    %539 = vmatpush1.bf16.msra.mxu0 0
    %540 = vmatprep.subr.bf16.mxu0 0
    %541 = vmatpush1.bf16.msra.mxu0 0
    %542 = vmatprep.subr.bf16.mxu0 0
    %543 = vmatpush1.bf16.msra.mxu0 0
    %544 = vmatprep.subr.bf16.mxu0 0
    %545 = vmatpush1.bf16.msra.mxu0 0
    %546 = vmatprep.subr.bf16.mxu0 0
    %547 = vmatpush1.bf16.msra.mxu0 0
    %548 = vmatprep.subr.bf16.mxu0 0
    %549 = vmatpush1.bf16.msra.mxu0 0
    %550 = vmatprep.subr.bf16.mxu0 0
    %551 = vmatpush1.bf16.msra.mxu0 0
    %552 = vmatprep.subr.bf16.mxu0 0
    %553 = vmatpush1.bf16.msra.mxu0 0
    %554 = vmatprep.subr.bf16.mxu0 0
    %555 = vmatpush1.bf16.msra.mxu0 0
    %556 = vmatprep.subr.bf16.mxu0 0
    %557 = vmatpush1.bf16.msra.mxu0 0
    %558 = vmatprep.subr.bf16.mxu0 0
    %559 = vmatpush1.bf16.msra.mxu0 0
    %560 = vmatprep.subr.bf16.mxu0 0
    %561 = vmatpush1.bf16.msra.mxu0 0
    %562 = vmatprep.mubr.bf16.mxu0 0
    %563 = vmatmul.mubr.bf16.gmra.mrb[0].mxu0 %v524
    %v564 = vpop.f32.mrb[0].mxu0
    %v565 = vadd.f32 0.0, %v564
    %v566 = vpop.f32.mrb[0].mxu0
    %v567 = vpop.f32.mrb[0].mxu0
    %v568 = vpop.f32.mrb[0].mxu0
    %569 = vdwg.mxu0
    %v570 = vpack.c.bf16 %v565, %v565
    %vm571 = vcmask 125952
    %572 = vst.msk [vmem:[#allocation3] sm:$0xf] %vm571, %v570
    %s573 = sld [smem:[#allocation7 + $0x1]]
    %v574 = vstv %s573
    %v575 = vmul.f32 %v426, %v574
    %s576 = sld [smem:[#allocation7 + $0x81]]
    %v577 = vstv %s576
    %v578 = vmul.f32 %v452, %v577
    %v579 = vadd.f32 %v575, %v578
    %s580 = sld [smem:[#allocation7 + $0x101]]
    %v581 = vstv %s580
    %v582 = vmul.f32 %v478, %v581
    %v583 = vadd.f32 %v579, %v582
    %s584 = sld [smem:[#allocation7 + $0x181]]
    %v585 = vstv %s584
    %v586 = vmul.f32 %v504, %v585
    %v587 = vadd.f32 %v583, %v586
    %v588 = vpack.c.bf16 %v587, %v587
    %589 = vrot.lane.b32.xlu0 %v251, 48
    %v590 = vpop.permute.xlu0 %589
    %v592 = vsel %vm415, %v588, 0
    %v595 = vsel %vm526, %v590, 0
    %597 = vmatprep.subr.bf16.mxu0 0
    %598 = vmatpush1.bf16.msra.mxu0 %v595
    %599 = vmatprep.subr.bf16.mxu0 0
    %600 = vmatpush1.bf16.msra.mxu0 0
    %601 = vmatprep.subr.bf16.mxu0 0
    %602 = vmatpush1.bf16.msra.mxu0 0
    %603 = vmatprep.subr.bf16.mxu0 0
    %604 = vmatpush1.bf16.msra.mxu0 0
    %605 = vmatprep.subr.bf16.mxu0 0
    %606 = vmatpush1.bf16.msra.mxu0 0
    %607 = vmatprep.subr.bf16.mxu0 0
    %608 = vmatpush1.bf16.msra.mxu0 0
    %609 = vmatprep.subr.bf16.mxu0 0
    %610 = vmatpush1.bf16.msra.mxu0 0
    %611 = vmatprep.subr.bf16.mxu0 0
    %612 = vmatpush1.bf16.msra.mxu0 0
    %613 = vmatprep.subr.bf16.mxu0 0
    %614 = vmatpush1.bf16.msra.mxu0 0
    %615 = vmatprep.subr.bf16.mxu0 0
    %616 = vmatpush1.bf16.msra.mxu0 0
    %617 = vmatprep.subr.bf16.mxu0 0
    %618 = vmatpush1.bf16.msra.mxu0 0
    %619 = vmatprep.subr.bf16.mxu0 0
    %620 = vmatpush1.bf16.msra.mxu0 0
    %621 = vmatprep.subr.bf16.mxu0 0
    %622 = vmatpush1.bf16.msra.mxu0 0
    %623 = vmatprep.subr.bf16.mxu0 0
    %624 = vmatpush1.bf16.msra.mxu0 0
    %625 = vmatprep.subr.bf16.mxu0 0
    %626 = vmatpush1.bf16.msra.mxu0 0
    %627 = vmatprep.subr.bf16.mxu0 0
    %628 = vmatpush1.bf16.msra.mxu0 0
    %629 = vmatprep.mubr.bf16.mxu0 0
    %630 = vmatmul.mubr.bf16.gmra.mrb[0].mxu0 %v592
    %v631 = vpop.f32.mrb[0].mxu0
    %v632 = vadd.f32 0.0, %v631
    %v633 = vpop.f32.mrb[0].mxu0
    %v634 = vpop.f32.mrb[0].mxu0
    %v635 = vpop.f32.mrb[0].mxu0
    %636 = vdwg.mxu0
    %v637 = vpack.c.bf16 %v632, %v632
    %v639 = vunpack.c.l.b16 %v637
    %v640 = vpack.c.b16 %v639, %v639
    %641 = vrot.lane.b32.xlu0 %v640, 16
    %v642 = vpop.permute.xlu0 %641
    %vm644 = vcmask 257152
    %645 = vst.msk [vmem:[#allocation3] sm:$0xf] %vm644, %v642
    %s646 = sld [smem:[#allocation7 + $0x2]]
    %v647 = vstv %s646
    %v648 = vmul.f32 %v426, %v647
    %s649 = sld [smem:[#allocation7 + $0x82]]
    %v650 = vstv %s649
    %v651 = vmul.f32 %v452, %v650
    %v652 = vadd.f32 %v648, %v651
    %s653 = sld [smem:[#allocation7 + $0x102]]
    %v654 = vstv %s653
    %v655 = vmul.f32 %v478, %v654
    %v656 = vadd.f32 %v652, %v655
    %s657 = sld [smem:[#allocation7 + $0x182]]
    %v658 = vstv %s657
    %v659 = vmul.f32 %v504, %v658
    %v660 = vadd.f32 %v656, %v659
    %v661 = vpack.c.bf16 %v660, %v660
    %662 = vrot.lane.b32.xlu0 %v251, 32
    %v663 = vpop.permute.xlu0 %662
    %v665 = vsel %vm415, %v661, 0
    %v668 = vsel %vm526, %v663, 0
    %670 = vmatprep.subr.bf16.mxu0 0
    %671 = vmatpush1.bf16.msra.mxu0 %v668
    %672 = vmatprep.subr.bf16.mxu0 0
    %673 = vmatpush1.bf16.msra.mxu0 0
    %674 = vmatprep.subr.bf16.mxu0 0
    %675 = vmatpush1.bf16.msra.mxu0 0
    %676 = vmatprep.subr.bf16.mxu0 0
    %677 = vmatpush1.bf16.msra.mxu0 0
    %678 = vmatprep.subr.bf16.mxu0 0
    %679 = vmatpush1.bf16.msra.mxu0 0
    %680 = vmatprep.subr.bf16.mxu0 0
    %681 = vmatpush1.bf16.msra.mxu0 0
    %682 = vmatprep.subr.bf16.mxu0 0
    %683 = vmatpush1.bf16.msra.mxu0 0
    %684 = vmatprep.subr.bf16.mxu0 0
    %685 = vmatpush1.bf16.msra.mxu0 0
    %686 = vmatprep.subr.bf16.mxu0 0
    %687 = vmatpush1.bf16.msra.mxu0 0
    %688 = vmatprep.subr.bf16.mxu0 0
    %689 = vmatpush1.bf16.msra.mxu0 0
    %690 = vmatprep.subr.bf16.mxu0 0
    %691 = vmatpush1.bf16.msra.mxu0 0
    %692 = vmatprep.subr.bf16.mxu0 0
    %693 = vmatpush1.bf16.msra.mxu0 0
    %694 = vmatprep.subr.bf16.mxu0 0
    %695 = vmatpush1.bf16.msra.mxu0 0
    %696 = vmatprep.subr.bf16.mxu0 0
    %697 = vmatpush1.bf16.msra.mxu0 0
    %698 = vmatprep.subr.bf16.mxu0 0
    %699 = vmatpush1.bf16.msra.mxu0 0
    %700 = vmatprep.subr.bf16.mxu0 0
    %701 = vmatpush1.bf16.msra.mxu0 0
    %702 = vmatprep.mubr.bf16.mxu0 0
    %703 = vmatmul.mubr.bf16.gmra.mrb[0].mxu0 %v665
    %v704 = vpop.f32.mrb[0].mxu0
    %v705 = vadd.f32 0.0, %v704
    %v706 = vpop.f32.mrb[0].mxu0
    %v707 = vpop.f32.mrb[0].mxu0
    %v708 = vpop.f32.mrb[0].mxu0
    %709 = vdwg.mxu0
    %v710 = vpack.c.bf16 %v705, %v705
    %v712 = vunpack.c.l.b16 %v710
    %v713 = vpack.c.b16 %v712, %v712
    %714 = vrot.lane.b32.xlu0 %v713, 32
    %v715 = vpop.permute.xlu0 %714
    %vm717 = vcmask 388352
    %718 = vst.msk [vmem:[#allocation3] sm:$0xf] %vm717, %v715
    %s719 = sld [smem:[#allocation7 + $0x3]]
    %v720 = vstv %s719
    %v721 = vmul.f32 %v426, %v720
    %s722 = sld [smem:[#allocation7 + $0x83]]
    %v723 = vstv %s722
    %v724 = vmul.f32 %v452, %v723
    %v725 = vadd.f32 %v721, %v724
    %s726 = sld [smem:[#allocation7 + $0x103]]
    %v727 = vstv %s726
    %v728 = vmul.f32 %v478, %v727
    %v729 = vadd.f32 %v725, %v728
    %s730 = sld [smem:[#allocation7 + $0x183]]
    %v731 = vstv %s730
    %v732 = vmul.f32 %v504, %v731
    %v733 = vadd.f32 %v729, %v732
    %v734 = vpack.c.bf16 %v733, %v733
    %735 = vrot.lane.b32.xlu0 %v251, 16
    %v736 = vpop.permute.xlu0 %735
    %v738 = vsel %vm415, %v734, 0
    %v741 = vsel %vm526, %v736, 0
    %743 = vmatprep.subr.bf16.mxu0 0
    %744 = vmatpush1.bf16.msra.mxu0 %v741
    %745 = vmatprep.subr.bf16.mxu0 0
    %746 = vmatpush1.bf16.msra.mxu0 0
    %747 = vmatprep.subr.bf16.mxu0 0
    %748 = vmatpush1.bf16.msra.mxu0 0
    %749 = vmatprep.subr.bf16.mxu0 0
    %750 = vmatpush1.bf16.msra.mxu0 0
    %751 = vmatprep.subr.bf16.mxu0 0
    %752 = vmatpush1.bf16.msra.mxu0 0
    %753 = vmatprep.subr.bf16.mxu0 0
    %754 = vmatpush1.bf16.msra.mxu0 0
    %755 = vmatprep.subr.bf16.mxu0 0
    %756 = vmatpush1.bf16.msra.mxu0 0
    %757 = vmatprep.subr.bf16.mxu0 0
    %758 = vmatpush1.bf16.msra.mxu0 0
    %759 = vmatprep.subr.bf16.mxu0 0
    %760 = vmatpush1.bf16.msra.mxu0 0
    %761 = vmatprep.subr.bf16.mxu0 0
    %762 = vmatpush1.bf16.msra.mxu0 0
    %763 = vmatprep.subr.bf16.mxu0 0
    %764 = vmatpush1.bf16.msra.mxu0 0
    %765 = vmatprep.subr.bf16.mxu0 0
    %766 = vmatpush1.bf16.msra.mxu0 0
    %767 = vmatprep.subr.bf16.mxu0 0
    %768 = vmatpush1.bf16.msra.mxu0 0
    %769 = vmatprep.subr.bf16.mxu0 0
    %770 = vmatpush1.bf16.msra.mxu0 0
    %771 = vmatprep.subr.bf16.mxu0 0
    %772 = vmatpush1.bf16.msra.mxu0 0
    %773 = vmatprep.subr.bf16.mxu0 0
    %774 = vmatpush1.bf16.msra.mxu0 0
    %775 = vmatprep.mubr.bf16.mxu0 0
    %776 = vmatmul.mubr.bf16.gmra.mrb[0].mxu0 %v738
    %v777 = vpop.f32.mrb[0].mxu0
    %v778 = vadd.f32 0.0, %v777
    %v779 = vpop.f32.mrb[0].mxu0
    %v780 = vpop.f32.mrb[0].mxu0
    %v781 = vpop.f32.mrb[0].mxu0
    %782 = vdwg.mxu0
    %v783 = vpack.c.bf16 %v778, %v778
    %v785 = vunpack.c.l.b16 %v783
    %v786 = vpack.c.b16 %v785, %v785
    %787 = vrot.lane.b32.xlu0 %v786, 48
    %v788 = vpop.permute.xlu0 %787
    %vm790 = vcmask 519552
    %791 = vst.msk [vmem:[#allocation3] sm:$0xf] %vm790, %v788
    %s792 = scalar_lea.vmem [#allocation2], 4
    %v793 = vld [vmem:[%s792] sm:$0xf]
    %v794 = vrot.slane %v197, 4
    %v796 = vsel %vm199, %v794, 0
    %v799 = vsel %vm199, %v793, 0
    %801 = vmatprep.subr.bf16.mxu0 0
    %802 = vmatpush1.bf16.xpose.msra.mxu0 %v799
    %803 = vmatprep.subr.bf16.mxu0 0
    %804 = vmatpush1.bf16.xpose.msra.mxu0 0
    %805 = vmatprep.subr.bf16.mxu0 0
    %806 = vmatpush1.bf16.xpose.msra.mxu0 0
    %807 = vmatprep.subr.bf16.mxu0 0
    %808 = vmatpush1.bf16.xpose.msra.mxu0 0
    %809 = vmatprep.subr.bf16.mxu0 0
    %810 = vmatpush1.bf16.xpose.msra.mxu0 0
    %811 = vmatprep.subr.bf16.mxu0 0
    %812 = vmatpush1.bf16.xpose.msra.mxu0 0
    %813 = vmatprep.subr.bf16.mxu0 0
    %814 = vmatpush1.bf16.xpose.msra.mxu0 0
    %815 = vmatprep.subr.bf16.mxu0 0
    %816 = vmatpush1.bf16.xpose.msra.mxu0 0
    %817 = vmatprep.subr.bf16.mxu0 0
    %818 = vmatpush1.bf16.xpose.msra.mxu0 0
    %819 = vmatprep.subr.bf16.mxu0 0
    %820 = vmatpush1.bf16.xpose.msra.mxu0 0
    %821 = vmatprep.subr.bf16.mxu0 0
    %822 = vmatpush1.bf16.xpose.msra.mxu0 0
    %823 = vmatprep.subr.bf16.mxu0 0
    %824 = vmatpush1.bf16.xpose.msra.mxu0 0
    %825 = vmatprep.subr.bf16.mxu0 0
    %826 = vmatpush1.bf16.xpose.msra.mxu0 0
    %827 = vmatprep.subr.bf16.mxu0 0
    %828 = vmatpush1.bf16.xpose.msra.mxu0 0
    %829 = vmatprep.subr.bf16.mxu0 0
    %830 = vmatpush1.bf16.xpose.msra.mxu0 0
    %831 = vmatprep.subr.bf16.mxu0 0
    %832 = vmatpush1.bf16.xpose.msra.mxu0 0
    %833 = vmatprep.mubr.bf16.mxu0 0
    %834 = vmatmul.mubr.bf16.gmra.mrb[0].mxu0 %v796
    %v835 = vpop.f32.mrb[0].mxu0
    %v836 = vadd.f32 0.0, %v835
    %v837 = vpop.f32.mrb[0].mxu0
    %v838 = vpop.f32.mrb[0].mxu0
    %v839 = vpop.f32.mrb[0].mxu0
    %840 = vdwg.mxu0
    %841 = vrot.lane.b32.xlu0 %v794, 112
    %v842 = vpop.permute.xlu0 %841
    %v844 = vunpack.c.l.b16 %v793
    %v845 = vpack.c.b16 %v844, %v844
    %846 = vrot.lane.b32.xlu0 %v845, 112
    %v847 = vpop.permute.xlu0 %846
    %v849 = vsel %vm199, %v842, 0
    %v852 = vsel %vm199, %v847, 0
    %854 = vmatprep.subr.bf16.mxu0 0
    %855 = vmatpush1.bf16.xpose.msra.mxu0 %v852
    %856 = vmatprep.subr.bf16.mxu0 0
    %857 = vmatpush1.bf16.xpose.msra.mxu0 0
    %858 = vmatprep.subr.bf16.mxu0 0
    %859 = vmatpush1.bf16.xpose.msra.mxu0 0
    %860 = vmatprep.subr.bf16.mxu0 0
    %861 = vmatpush1.bf16.xpose.msra.mxu0 0
    %862 = vmatprep.subr.bf16.mxu0 0
    %863 = vmatpush1.bf16.xpose.msra.mxu0 0
    %864 = vmatprep.subr.bf16.mxu0 0
    %865 = vmatpush1.bf16.xpose.msra.mxu0 0
    %866 = vmatprep.subr.bf16.mxu0 0
    %867 = vmatpush1.bf16.xpose.msra.mxu0 0
    %868 = vmatprep.subr.bf16.mxu0 0
    %869 = vmatpush1.bf16.xpose.msra.mxu0 0
    %870 = vmatprep.subr.bf16.mxu0 0
    %871 = vmatpush1.bf16.xpose.msra.mxu0 0
    %872 = vmatprep.subr.bf16.mxu0 0
    %873 = vmatpush1.bf16.xpose.msra.mxu0 0
    %874 = vmatprep.subr.bf16.mxu0 0
    %875 = vmatpush1.bf16.xpose.msra.mxu0 0
    %876 = vmatprep.subr.bf16.mxu0 0
    %877 = vmatpush1.bf16.xpose.msra.mxu0 0
    %878 = vmatprep.subr.bf16.mxu0 0
    %879 = vmatpush1.bf16.xpose.msra.mxu0 0
    %880 = vmatprep.subr.bf16.mxu0 0
    %881 = vmatpush1.bf16.xpose.msra.mxu0 0
    %882 = vmatprep.subr.bf16.mxu0 0
    %883 = vmatpush1.bf16.xpose.msra.mxu0 0
    %884 = vmatprep.subr.bf16.mxu0 0
    %885 = vmatpush1.bf16.xpose.msra.mxu0 0
    %886 = vmatprep.mubr.bf16.mxu0 0
    %887 = vmatmul.mubr.bf16.gmra.mrb[0].mxu0 %v849
    %v888 = vpop.f32.mrb[0].mxu0
    %v889 = vadd.f32 0.0, %v888
    %v890 = vpop.f32.mrb[0].mxu0
    %v891 = vpop.f32.mrb[0].mxu0
    %v892 = vpop.f32.mrb[0].mxu0
    %893 = vdwg.mxu0
    %894 = vrot.lane.b32.xlu0 %v794, 96
    %v895 = vpop.permute.xlu0 %894
    %896 = vrot.lane.b32.xlu0 %v845, 96
    %v897 = vpop.permute.xlu0 %896
    %v899 = vsel %vm199, %v895, 0
    %v902 = vsel %vm199, %v897, 0
    %904 = vmatprep.subr.bf16.mxu0 0
    %905 = vmatpush1.bf16.xpose.msra.mxu0 %v902
    %906 = vmatprep.subr.bf16.mxu0 0
    %907 = vmatpush1.bf16.xpose.msra.mxu0 0
    %908 = vmatprep.subr.bf16.mxu0 0
    %909 = vmatpush1.bf16.xpose.msra.mxu0 0
    %910 = vmatprep.subr.bf16.mxu0 0
    %911 = vmatpush1.bf16.xpose.msra.mxu0 0
    %912 = vmatprep.subr.bf16.mxu0 0
    %913 = vmatpush1.bf16.xpose.msra.mxu0 0
    %914 = vmatprep.subr.bf16.mxu0 0
    %915 = vmatpush1.bf16.xpose.msra.mxu0 0
    %916 = vmatprep.subr.bf16.mxu0 0
    %917 = vmatpush1.bf16.xpose.msra.mxu0 0
    %918 = vmatprep.subr.bf16.mxu0 0
    %919 = vmatpush1.bf16.xpose.msra.mxu0 0
    %920 = vmatprep.subr.bf16.mxu0 0
    %921 = vmatpush1.bf16.xpose.msra.mxu0 0
    %922 = vmatprep.subr.bf16.mxu0 0
    %923 = vmatpush1.bf16.xpose.msra.mxu0 0
    %924 = vmatprep.subr.bf16.mxu0 0
    %925 = vmatpush1.bf16.xpose.msra.mxu0 0
    %926 = vmatprep.subr.bf16.mxu0 0
    %927 = vmatpush1.bf16.xpose.msra.mxu0 0
    %928 = vmatprep.subr.bf16.mxu0 0
    %929 = vmatpush1.bf16.xpose.msra.mxu0 0
    %930 = vmatprep.subr.bf16.mxu0 0
    %931 = vmatpush1.bf16.xpose.msra.mxu0 0
    %932 = vmatprep.subr.bf16.mxu0 0
    %933 = vmatpush1.bf16.xpose.msra.mxu0 0
    %934 = vmatprep.subr.bf16.mxu0 0
    %935 = vmatpush1.bf16.xpose.msra.mxu0 0
    %936 = vmatprep.mubr.bf16.mxu0 0
    %937 = vmatmul.mubr.bf16.gmra.mrb[0].mxu0 %v899
    %v938 = vpop.f32.mrb[0].mxu0
    %v939 = vadd.f32 0.0, %v938
    %v940 = vpop.f32.mrb[0].mxu0
    %v941 = vpop.f32.mrb[0].mxu0
    %v942 = vpop.f32.mrb[0].mxu0
    %943 = vdwg.mxu0
    %944 = vrot.lane.b32.xlu0 %v794, 80
    %v945 = vpop.permute.xlu0 %944
    %946 = vrot.lane.b32.xlu0 %v845, 80
    %v947 = vpop.permute.xlu0 %946
    %v949 = vsel %vm199, %v945, 0
    %v952 = vsel %vm199, %v947, 0
    %954 = vmatprep.subr.bf16.mxu0 0
    %955 = vmatpush1.bf16.xpose.msra.mxu0 %v952
    %956 = vmatprep.subr.bf16.mxu0 0
    %957 = vmatpush1.bf16.xpose.msra.mxu0 0
    %958 = vmatprep.subr.bf16.mxu0 0
    %959 = vmatpush1.bf16.xpose.msra.mxu0 0
    %960 = vmatprep.subr.bf16.mxu0 0
    %961 = vmatpush1.bf16.xpose.msra.mxu0 0
    %962 = vmatprep.subr.bf16.mxu0 0
    %963 = vmatpush1.bf16.xpose.msra.mxu0 0
    %964 = vmatprep.subr.bf16.mxu0 0
    %965 = vmatpush1.bf16.xpose.msra.mxu0 0
    %966 = vmatprep.subr.bf16.mxu0 0
    %967 = vmatpush1.bf16.xpose.msra.mxu0 0
    %968 = vmatprep.subr.bf16.mxu0 0
    %969 = vmatpush1.bf16.xpose.msra.mxu0 0
    %970 = vmatprep.subr.bf16.mxu0 0
    %971 = vmatpush1.bf16.xpose.msra.mxu0 0
    %972 = vmatprep.subr.bf16.mxu0 0
    %973 = vmatpush1.bf16.xpose.msra.mxu0 0
    %974 = vmatprep.subr.bf16.mxu0 0
    %975 = vmatpush1.bf16.xpose.msra.mxu0 0
    %976 = vmatprep.subr.bf16.mxu0 0
    %977 = vmatpush1.bf16.xpose.msra.mxu0 0
    %978 = vmatprep.subr.bf16.mxu0 0
    %979 = vmatpush1.bf16.xpose.msra.mxu0 0
    %980 = vmatprep.subr.bf16.mxu0 0
    %981 = vmatpush1.bf16.xpose.msra.mxu0 0
    %982 = vmatprep.subr.bf16.mxu0 0
    %983 = vmatpush1.bf16.xpose.msra.mxu0 0
    %984 = vmatprep.subr.bf16.mxu0 0
    %985 = vmatpush1.bf16.xpose.msra.mxu0 0
    %986 = vmatprep.mubr.bf16.mxu0 0
    %987 = vmatmul.mubr.bf16.gmra.mrb[0].mxu0 %v949
    %v988 = vpop.f32.mrb[0].mxu0
    %v989 = vadd.f32 0.0, %v988
    %v990 = vpop.f32.mrb[0].mxu0
    %v991 = vpop.f32.mrb[0].mxu0
    %v992 = vpop.f32.mrb[0].mxu0
    %993 = vdwg.mxu0
    %s994 = sld [smem:[#allocation4]]
    %v995 = vstv %s994
    %v996 = vmul.f32 %v836, %v995
    %s997 = sld [smem:[#allocation4 + $0x80]]
    %v998 = vstv %s997
    %v999 = vmul.f32 %v889, %v998
    %v1000 = vadd.f32 %v996, %v999
    %s1001 = sld [smem:[#allocation4 + $0x100]]
    %v1002 = vstv %s1001
    %v1003 = vmul.f32 %v939, %v1002
    %v1004 = vadd.f32 %v1000, %v1003
    %s1005 = sld [smem:[#allocation4 + $0x180]]
    %v1006 = vstv %s1005
    %v1007 = vmul.f32 %v989, %v1006
    %v1008 = vadd.f32 %v1004, %v1007
    %v1009 = vsel %vm415, %v1008, -inf
    %1010 = vmax.xlane.f32.xlu0 %v1009
    %v1011 = vpop.xlane.xlu0 %1010
    %v1012 = vsub.f32 %v1008, %v1011
    %v1013 = vmul.f32 %v1012, 1.442695
    %v1014 = vpow.pop %v1013
    %v1015 = vsel %vm415, %v1014, 0.0
    %1016 = vadd.xlane.f32.xlu0 %v1015
    %v1017 = vpop.xlane.xlu0 %1016
    %v1018 = vrcp.pop %v1017
    %v1019 = vmul.f32 %v1014, %v1018
    %s1020 = sld [smem:[#allocation4 + $0x1]]
    %v1021 = vstv %s1020
    %v1022 = vmul.f32 %v836, %v1021
    %s1023 = sld [smem:[#allocation4 + $0x81]]
    %v1024 = vstv %s1023
    %v1025 = vmul.f32 %v889, %v1024
    %v1026 = vadd.f32 %v1022, %v1025
    %s1027 = sld [smem:[#allocation4 + $0x101]]
    %v1028 = vstv %s1027
    %v1029 = vmul.f32 %v939, %v1028
    %v1030 = vadd.f32 %v1026, %v1029
    %s1031 = sld [smem:[#allocation4 + $0x181]]
    %v1032 = vstv %s1031
    %v1033 = vmul.f32 %v989, %v1032
    %v1034 = vadd.f32 %v1030, %v1033
    %v1035 = vsel %vm415, %v1034, -inf
    %1036 = vmax.xlane.f32.xlu0 %v1035
    %v1037 = vpop.xlane.xlu0 %1036
    %v1038 = vsub.f32 %v1034, %v1037
    %v1039 = vmul.f32 %v1038, 1.442695
    %v1040 = vpow.pop %v1039
    %v1041 = vsel %vm415, %v1040, 0.0
    %1042 = vadd.xlane.f32.xlu0 %v1041
    %v1043 = vpop.xlane.xlu0 %1042
    %v1044 = vrcp.pop %v1043
    %v1045 = vmul.f32 %v1040, %v1044
    %s1046 = sld [smem:[#allocation4 + $0x2]]
    %v1047 = vstv %s1046
    %v1048 = vmul.f32 %v836, %v1047
    %s1049 = sld [smem:[#allocation4 + $0x82]]
    %v1050 = vstv %s1049
    %v1051 = vmul.f32 %v889, %v1050
    %v1052 = vadd.f32 %v1048, %v1051
    %s1053 = sld [smem:[#allocation4 + $0x102]]
    %v1054 = vstv %s1053
    %v1055 = vmul.f32 %v939, %v1054
    %v1056 = vadd.f32 %v1052, %v1055
    %s1057 = sld [smem:[#allocation4 + $0x182]]
    %v1058 = vstv %s1057
    %v1059 = vmul.f32 %v989, %v1058
    %v1060 = vadd.f32 %v1056, %v1059
    %v1061 = vsel %vm415, %v1060, -inf
    %1062 = vmax.xlane.f32.xlu0 %v1061
    %v1063 = vpop.xlane.xlu0 %1062
    %v1064 = vsub.f32 %v1060, %v1063
    %v1065 = vmul.f32 %v1064, 1.442695
    %v1066 = vpow.pop %v1065
    %v1067 = vsel %vm415, %v1066, 0.0
    %1068 = vadd.xlane.f32.xlu0 %v1067
    %v1069 = vpop.xlane.xlu0 %1068
    %v1070 = vrcp.pop %v1069
    %v1071 = vmul.f32 %v1066, %v1070
    %s1072 = sld [smem:[#allocation4 + $0x3]]
    %v1073 = vstv %s1072
    %v1074 = vmul.f32 %v836, %v1073
    %s1075 = sld [smem:[#allocation4 + $0x83]]
    %v1076 = vstv %s1075
    %v1077 = vmul.f32 %v889, %v1076
    %v1078 = vadd.f32 %v1074, %v1077
    %s1079 = sld [smem:[#allocation4 + $0x103]]
    %v1080 = vstv %s1079
    %v1081 = vmul.f32 %v939, %v1080
    %v1082 = vadd.f32 %v1078, %v1081
    %s1083 = sld [smem:[#allocation4 + $0x183]]
    %v1084 = vstv %s1083
    %v1085 = vmul.f32 %v989, %v1084
    %v1086 = vadd.f32 %v1082, %v1085
    %v1087 = vsel %vm415, %v1086, -inf
    %1088 = vmax.xlane.f32.xlu0 %v1087
    %v1089 = vpop.xlane.xlu0 %1088
    %v1090 = vsub.f32 %v1086, %v1089
    %v1091 = vmul.f32 %v1090, 1.442695
    %v1092 = vpow.pop %v1091
    %v1093 = vsel %vm415, %v1092, 0.0
    %1094 = vadd.xlane.f32.xlu0 %v1093
    %v1095 = vpop.xlane.xlu0 %1094
    %v1096 = vrcp.pop %v1095
    %v1097 = vmul.f32 %v1092, %v1096
    %s1098 = sld [smem:[#allocation7]]
    %v1099 = vstv %s1098
    %v1100 = vmul.f32 %v1019, %v1099
    %s1101 = sld [smem:[#allocation7 + $0x80]]
    %v1102 = vstv %s1101
    %v1103 = vmul.f32 %v1045, %v1102
    %v1104 = vadd.f32 %v1100, %v1103
    %s1105 = sld [smem:[#allocation7 + $0x100]]
    %v1106 = vstv %s1105
    %v1107 = vmul.f32 %v1071, %v1106
    %v1108 = vadd.f32 %v1104, %v1107
    %s1109 = sld [smem:[#allocation7 + $0x180]]
    %v1110 = vstv %s1109
    %v1111 = vmul.f32 %v1097, %v1110
    %v1112 = vadd.f32 %v1108, %v1111
    %v1113 = vpack.c.bf16 %v1112, %v1112
    %1114 = vrot.lane.b32.xlu0 %v845, 64
    %v1115 = vpop.permute.xlu0 %1114
    %v1117 = vsel %vm415, %v1113, 0
    %v1120 = vsel %vm526, %v1115, 0
    %1122 = vmatprep.subr.bf16.mxu0 0
    %1123 = vmatpush1.bf16.msra.mxu0 %v1120
    %1124 = vmatprep.subr.bf16.mxu0 0
    %1125 = vmatpush1.bf16.msra.mxu0 0
    %1126 = vmatprep.subr.bf16.mxu0 0
    %1127 = vmatpush1.bf16.msra.mxu0 0
    %1128 = vmatprep.subr.bf16.mxu0 0
    %1129 = vmatpush1.bf16.msra.mxu0 0
    %1130 = vmatprep.subr.bf16.mxu0 0
    %1131 = vmatpush1.bf16.msra.mxu0 0
    %1132 = vmatprep.subr.bf16.mxu0 0
    %1133 = vmatpush1.bf16.msra.mxu0 0
    %1134 = vmatprep.subr.bf16.mxu0 0
    %1135 = vmatpush1.bf16.msra.mxu0 0
    %1136 = vmatprep.subr.bf16.mxu0 0
    %1137 = vmatpush1.bf16.msra.mxu0 0
    %1138 = vmatprep.subr.bf16.mxu0 0
    %1139 = vmatpush1.bf16.msra.mxu0 0
    %1140 = vmatprep.subr.bf16.mxu0 0
    %1141 = vmatpush1.bf16.msra.mxu0 0
    %1142 = vmatprep.subr.bf16.mxu0 0
    %1143 = vmatpush1.bf16.msra.mxu0 0
    %1144 = vmatprep.subr.bf16.mxu0 0
    %1145 = vmatpush1.bf16.msra.mxu0 0
    %1146 = vmatprep.subr.bf16.mxu0 0
    %1147 = vmatpush1.bf16.msra.mxu0 0
    %1148 = vmatprep.subr.bf16.mxu0 0
    %1149 = vmatpush1.bf16.msra.mxu0 0
    %1150 = vmatprep.subr.bf16.mxu0 0
    %1151 = vmatpush1.bf16.msra.mxu0 0
    %1152 = vmatprep.subr.bf16.mxu0 0
    %1153 = vmatpush1.bf16.msra.mxu0 0
    %1154 = vmatprep.mubr.bf16.mxu0 0
    %1155 = vmatmul.mubr.bf16.gmra.mrb[0].mxu0 %v1117
    %v1156 = vpop.f32.mrb[0].mxu0
    %v1157 = vadd.f32 0.0, %v1156
    %v1158 = vpop.f32.mrb[0].mxu0
    %v1159 = vpop.f32.mrb[0].mxu0
    %v1160 = vpop.f32.mrb[0].mxu0
    %1161 = vdwg.mxu0
    %v1162 = vpack.c.bf16 %v1157, %v1157
    %s1163 = scalar_lea.vmem [#allocation3], 4
    %1164 = vst.msk [vmem:[%s1163] sm:$0xf] %vm571, %v1162
    %s1165 = sld [smem:[#allocation7 + $0x1]]
    %v1166 = vstv %s1165
    %v1167 = vmul.f32 %v1019, %v1166
    %s1168 = sld [smem:[#allocation7 + $0x81]]
    %v1169 = vstv %s1168
    %v1170 = vmul.f32 %v1045, %v1169
    %v1171 = vadd.f32 %v1167, %v1170
    %s1172 = sld [smem:[#allocation7 + $0x101]]
    %v1173 = vstv %s1172
    %v1174 = vmul.f32 %v1071, %v1173
    %v1175 = vadd.f32 %v1171, %v1174
    %s1176 = sld [smem:[#allocation7 + $0x181]]
    %v1177 = vstv %s1176
    %v1178 = vmul.f32 %v1097, %v1177
    %v1179 = vadd.f32 %v1175, %v1178
    %v1180 = vpack.c.bf16 %v1179, %v1179
    %1181 = vrot.lane.b32.xlu0 %v845, 48
    %v1182 = vpop.permute.xlu0 %1181
    %v1184 = vsel %vm415, %v1180, 0
    %v1187 = vsel %vm526, %v1182, 0
    %1189 = vmatprep.subr.bf16.mxu0 0
    %1190 = vmatpush1.bf16.msra.mxu0 %v1187
    %1191 = vmatprep.subr.bf16.mxu0 0
    %1192 = vmatpush1.bf16.msra.mxu0 0
    %1193 = vmatprep.subr.bf16.mxu0 0
    %1194 = vmatpush1.bf16.msra.mxu0 0
    %1195 = vmatprep.subr.bf16.mxu0 0
    %1196 = vmatpush1.bf16.msra.mxu0 0
    %1197 = vmatprep.subr.bf16.mxu0 0
    %1198 = vmatpush1.bf16.msra.mxu0 0
    %1199 = vmatprep.subr.bf16.mxu0 0
    %1200 = vmatpush1.bf16.msra.mxu0 0
    %1201 = vmatprep.subr.bf16.mxu0 0
    %1202 = vmatpush1.bf16.msra.mxu0 0
    %1203 = vmatprep.subr.bf16.mxu0 0
    %1204 = vmatpush1.bf16.msra.mxu0 0
    %1205 = vmatprep.subr.bf16.mxu0 0
    %1206 = vmatpush1.bf16.msra.mxu0 0
    %1207 = vmatprep.subr.bf16.mxu0 0
    %1208 = vmatpush1.bf16.msra.mxu0 0
    %1209 = vmatprep.subr.bf16.mxu0 0
    %1210 = vmatpush1.bf16.msra.mxu0 0
    %1211 = vmatprep.subr.bf16.mxu0 0
    %1212 = vmatpush1.bf16.msra.mxu0 0
    %1213 = vmatprep.subr.bf16.mxu0 0
    %1214 = vmatpush1.bf16.msra.mxu0 0
    %1215 = vmatprep.subr.bf16.mxu0 0
    %1216 = vmatpush1.bf16.msra.mxu0 0
    %1217 = vmatprep.subr.bf16.mxu0 0
    %1218 = vmatpush1.bf16.msra.mxu0 0
    %1219 = vmatprep.subr.bf16.mxu0 0
    %1220 = vmatpush1.bf16.msra.mxu0 0
    %1221 = vmatprep.mubr.bf16.mxu0 0
    %1222 = vmatmul.mubr.bf16.gmra.mrb[0].mxu0 %v1184
    %v1223 = vpop.f32.mrb[0].mxu0
    %v1224 = vadd.f32 0.0, %v1223
    %v1225 = vpop.f32.mrb[0].mxu0
    %v1226 = vpop.f32.mrb[0].mxu0
    %v1227 = vpop.f32.mrb[0].mxu0
    %1228 = vdwg.mxu0
    %v1229 = vpack.c.bf16 %v1224, %v1224
    %v1231 = vunpack.c.l.b16 %v1229
    %v1232 = vpack.c.b16 %v1231, %v1231
    %1233 = vrot.lane.b32.xlu0 %v1232, 16
    %v1234 = vpop.permute.xlu0 %1233
    %1236 = vst.msk [vmem:[%s1163] sm:$0xf] %vm644, %v1234
    %s1237 = sld [smem:[#allocation7 + $0x2]]
    %v1238 = vstv %s1237
    %v1239 = vmul.f32 %v1019, %v1238
    %s1240 = sld [smem:[#allocation7 + $0x82]]
    %v1241 = vstv %s1240
    %v1242 = vmul.f32 %v1045, %v1241
    %v1243 = vadd.f32 %v1239, %v1242
    %s1244 = sld [smem:[#allocation7 + $0x102]]
    %v1245 = vstv %s1244
    %v1246 = vmul.f32 %v1071, %v1245
    %v1247 = vadd.f32 %v1243, %v1246
    %s1248 = sld [smem:[#allocation7 + $0x182]]
    %v1249 = vstv %s1248
    %v1250 = vmul.f32 %v1097, %v1249
    %v1251 = vadd.f32 %v1247, %v1250
    %v1252 = vpack.c.bf16 %v1251, %v1251
    %1253 = vrot.lane.b32.xlu0 %v845, 32
    %v1254 = vpop.permute.xlu0 %1253
    %v1256 = vsel %vm415, %v1252, 0
    %v1259 = vsel %vm526, %v1254, 0
    %1261 = vmatprep.subr.bf16.mxu0 0
    %1262 = vmatpush1.bf16.msra.mxu0 %v1259
    %1263 = vmatprep.subr.bf16.mxu0 0
    %1264 = vmatpush1.bf16.msra.mxu0 0
    %1265 = vmatprep.subr.bf16.mxu0 0
    %1266 = vmatpush1.bf16.msra.mxu0 0
    %1267 = vmatprep.subr.bf16.mxu0 0
    %1268 = vmatpush1.bf16.msra.mxu0 0
    %1269 = vmatprep.subr.bf16.mxu0 0
    %1270 = vmatpush1.bf16.msra.mxu0 0
    %1271 = vmatprep.subr.bf16.mxu0 0
    %1272 = vmatpush1.bf16.msra.mxu0 0
    %1273 = vmatprep.subr.bf16.mxu0 0
    %1274 = vmatpush1.bf16.msra.mxu0 0
    %1275 = vmatprep.subr.bf16.mxu0 0
    %1276 = vmatpush1.bf16.msra.mxu0 0
    %1277 = vmatprep.subr.bf16.mxu0 0
    %1278 = vmatpush1.bf16.msra.mxu0 0
    %1279 = vmatprep.subr.bf16.mxu0 0
    %1280 = vmatpush1.bf16.msra.mxu0 0
    %1281 = vmatprep.subr.bf16.mxu0 0
    %1282 = vmatpush1.bf16.msra.mxu0 0
    %1283 = vmatprep.subr.bf16.mxu0 0
    %1284 = vmatpush1.bf16.msra.mxu0 0
    %1285 = vmatprep.subr.bf16.mxu0 0
    %1286 = vmatpush1.bf16.msra.mxu0 0
    %1287 = vmatprep.subr.bf16.mxu0 0
    %1288 = vmatpush1.bf16.msra.mxu0 0
    %1289 = vmatprep.subr.bf16.mxu0 0
    %1290 = vmatpush1.bf16.msra.mxu0 0
    %1291 = vmatprep.subr.bf16.mxu0 0
    %1292 = vmatpush1.bf16.msra.mxu0 0
    %1293 = vmatprep.mubr.bf16.mxu0 0
    %1294 = vmatmul.mubr.bf16.gmra.mrb[0].mxu0 %v1256
    %v1295 = vpop.f32.mrb[0].mxu0
    %v1296 = vadd.f32 0.0, %v1295
    %v1297 = vpop.f32.mrb[0].mxu0
    %v1298 = vpop.f32.mrb[0].mxu0
    %v1299 = vpop.f32.mrb[0].mxu0
    %1300 = vdwg.mxu0
    %v1301 = vpack.c.bf16 %v1296, %v1296
    %v1303 = vunpack.c.l.b16 %v1301
    %v1304 = vpack.c.b16 %v1303, %v1303
    %1305 = vrot.lane.b32.xlu0 %v1304, 32
    %v1306 = vpop.permute.xlu0 %1305
    %1308 = vst.msk [vmem:[%s1163] sm:$0xf] %vm717, %v1306
    %s1309 = sld [smem:[#allocation7 + $0x3]]
    %v1310 = vstv %s1309
    %v1311 = vmul.f32 %v1019, %v1310
    %s1312 = sld [smem:[#allocation7 + $0x83]]
    %v1313 = vstv %s1312
    %v1314 = vmul.f32 %v1045, %v1313
    %v1315 = vadd.f32 %v1311, %v1314
    %s1316 = sld [smem:[#allocation7 + $0x103]]
    %v1317 = vstv %s1316
    %v1318 = vmul.f32 %v1071, %v1317
    %v1319 = vadd.f32 %v1315, %v1318
    %s1320 = sld [smem:[#allocation7 + $0x183]]
    %v1321 = vstv %s1320
    %v1322 = vmul.f32 %v1097, %v1321
    %v1323 = vadd.f32 %v1319, %v1322
    %v1324 = vpack.c.bf16 %v1323, %v1323
    %1325 = vrot.lane.b32.xlu0 %v845, 16
    %v1326 = vpop.permute.xlu0 %1325
    %v1328 = vsel %vm415, %v1324, 0
    %v1331 = vsel %vm526, %v1326, 0
    %1333 = vmatprep.subr.bf16.mxu0 0
    %1334 = vmatpush1.bf16.msra.mxu0 %v1331
    %1335 = vmatprep.subr.bf16.mxu0 0
    %1336 = vmatpush1.bf16.msra.mxu0 0
    %1337 = vmatprep.subr.bf16.mxu0 0
    %1338 = vmatpush1.bf16.msra.mxu0 0
    %1339 = vmatprep.subr.bf16.mxu0 0
    %1340 = vmatpush1.bf16.msra.mxu0 0
    %1341 = vmatprep.subr.bf16.mxu0 0
    %1342 = vmatpush1.bf16.msra.mxu0 0
    %1343 = vmatprep.subr.bf16.mxu0 0
    %1344 = vmatpush1.bf16.msra.mxu0 0
    %1345 = vmatprep.subr.bf16.mxu0 0
    %1346 = vmatpush1.bf16.msra.mxu0 0
    %1347 = vmatprep.subr.bf16.mxu0 0
    %1348 = vmatpush1.bf16.msra.mxu0 0
    %1349 = vmatprep.subr.bf16.mxu0 0
    %1350 = vmatpush1.bf16.msra.mxu0 0
    %1351 = vmatprep.subr.bf16.mxu0 0
    %1352 = vmatpush1.bf16.msra.mxu0 0
    %1353 = vmatprep.subr.bf16.mxu0 0
    %1354 = vmatpush1.bf16.msra.mxu0 0
    %1355 = vmatprep.subr.bf16.mxu0 0
    %1356 = vmatpush1.bf16.msra.mxu0 0
    %1357 = vmatprep.subr.bf16.mxu0 0
    %1358 = vmatpush1.bf16.msra.mxu0 0
    %1359 = vmatprep.subr.bf16.mxu0 0
    %1360 = vmatpush1.bf16.msra.mxu0 0
    %1361 = vmatprep.subr.bf16.mxu0 0
    %1362 = vmatpush1.bf16.msra.mxu0 0
    %1363 = vmatprep.subr.bf16.mxu0 0
    %1364 = vmatpush1.bf16.msra.mxu0 0
    %1365 = vmatprep.mubr.bf16.mxu0 0
    %1366 = vmatmul.mubr.bf16.gmra.mrb[0].mxu0 %v1328
    %v1367 = vpop.f32.mrb[0].mxu0
    %v1368 = vadd.f32 0.0, %v1367
    %v1369 = vpop.f32.mrb[0].mxu0
    %v1370 = vpop.f32.mrb[0].mxu0
    %v1371 = vpop.f32.mrb[0].mxu0
    %1372 = vdwg.mxu0
    %v1373 = vpack.c.bf16 %v1368, %v1368
    %v1375 = vunpack.c.l.b16 %v1373
    %v1376 = vpack.c.b16 %v1375, %v1375
    %1377 = vrot.lane.b32.xlu0 %v1376, 48
    %v1378 = vpop.permute.xlu0 %1377
    %1380 = vst.msk [vmem:[%s1163] sm:$0xf] %vm790, %v1378
    %v1381 = vld [vmem:[#allocation3] sm:$0xf]
    %v1382 = vld [vmem:[#allocation3 + $0x4] sm:$0xf]
    %v1383 = vld [vmem:[%s5] sm:$0xf]
    %v1384 = vld [vmem:[%s5 + $0x4] sm:$0xf]
    %v1385 = vld [vmem:[%s5 + $0x8] sm:$0xf]
    %v1386 = vld [vmem:[%s5 + $0xc] sm:$0xf]
    %v1387 = vld [vmem:[%s5 + $0x10] sm:$0xf]
    %v1388 = vld [vmem:[%s5 + $0x14] sm:$0xf]
    %v1389 = vld [vmem:[%s5 + $0x18] sm:$0xf]
    %v1390 = vld [vmem:[%s5 + $0x1c] sm:$0xf]
    %v1391 = vld [vmem:[%s6] sm:$0x1]
    %v1393 = vlaneseq
    %v1394 = vshrl.u32 %v1393, 7
    %v1395 = vsub.s32 0, %v1394
    %v1396 = vrot.slane %v1391, %v1395
    %v1400 = vunpack.c.l.b16 %v1381
    %v1401 = vunpack.c.l.b16 %v1382
    %v1402 = vpack.c.b16 %v1401, %v1400
    %v1411 = vunpack.c.l.b16 %v1383
    %v1412 = vunpack.c.l.b16 %v1384
    %v1413 = vunpack.c.l.b16 %v1385
    %v1414 = vunpack.c.l.b16 %v1386
    %v1415 = vunpack.c.l.b16 %v1387
    %v1416 = vunpack.c.l.b16 %v1388
    %v1417 = vunpack.c.l.b16 %v1389
    %v1418 = vunpack.c.l.b16 %v1390
    %v1419 = vpack.c.b16 %v1412, %v1411
    %v1420 = vpack.c.b16 %v1414, %v1413
    %v1421 = vpack.c.b16 %v1416, %v1415
    %v1422 = vpack.c.b16 %v1418, %v1417
    %vm1427 = vcmask 523264
    %v1429 = vsel %vm1427, %v1402, 0
    %1431 = vmatprep.subr.bf16.mxu0 0
    %1432 = vmatpush1.bf16.msra.mxu0 %v1419
    %1433 = vmatprep.subr.bf16.mxu0 0
    %1434 = vmatpush1.bf16.msra.mxu0 %v1420
    %1435 = vmatprep.subr.bf16.mxu0 0
    %1436 = vmatpush1.bf16.msra.mxu0 %v1421
    %1437 = vmatprep.subr.bf16.mxu0 0
    %1438 = vmatpush1.bf16.msra.mxu0 %v1422
    %1439 = vmatprep.subr.bf16.mxu0 0
    %1440 = vmatpush1.bf16.msra.mxu0 0
    %1441 = vmatprep.subr.bf16.mxu0 0
    %1442 = vmatpush1.bf16.msra.mxu0 0
    %1443 = vmatprep.subr.bf16.mxu0 0
    %1444 = vmatpush1.bf16.msra.mxu0 0
    %1445 = vmatprep.subr.bf16.mxu0 0
    %1446 = vmatpush1.bf16.msra.mxu0 0
    %1447 = vmatprep.subr.bf16.mxu0 0
    %1448 = vmatpush1.bf16.msra.mxu0 0
    %1449 = vmatprep.subr.bf16.mxu0 0
    %1450 = vmatpush1.bf16.msra.mxu0 0
    %1451 = vmatprep.subr.bf16.mxu0 0
    %1452 = vmatpush1.bf16.msra.mxu0 0
    %1453 = vmatprep.subr.bf16.mxu0 0
    %1454 = vmatpush1.bf16.msra.mxu0 0
    %1455 = vmatprep.subr.bf16.mxu0 0
    %1456 = vmatpush1.bf16.msra.mxu0 0
    %1457 = vmatprep.subr.bf16.mxu0 0
    %1458 = vmatpush1.bf16.msra.mxu0 0
    %1459 = vmatprep.subr.bf16.mxu0 0
    %1460 = vmatpush1.bf16.msra.mxu0 0
    %1461 = vmatprep.subr.bf16.mxu0 0
    %1462 = vmatpush1.bf16.msra.mxu0 0
    %1463 = vmatprep.mubr.bf16.mxu0 0
    %1464 = vmatmul.mubr.bf16.gmra.mrb[0].mxu0 %v1429
    %v1465 = vpop.f32.mrb[0].mxu0
    %v1466 = vadd.f32 %v1396, %v1465
    %v1467 = vpop.f32.mrb[0].mxu0
    %v1468 = vpop.f32.mrb[0].mxu0
    %v1469 = vadd.f32 %v1396, %v1468
    %v1470 = vpop.f32.mrb[0].mxu0
    %1471 = vdwg.mxu0
    %1472 = vst.msk [vmem:[#allocation9] sm:$0xff] %vm152, %v1466
    %1473 = vst.msk [vmem:[#allocation9 + $0x8] sm:$0xff] %vm152, %v1469
    // Predicated region
    $region42: #{tpu_custom_call.1} parent=1 // pred_check
      _
    $region43: #{tpu_custom_call.1} parent=1 // pred_check_branch
      %1475 = sbr.rel (0) target = $region45
    $region44: #{tpu_custom_call.1} parent=1 // pred_region
      %s1477 = ssub.s32 256, 256
      %1478 = vsyncadd [#allocation5], %s1477
      %s1479 = sshll.u32 [#allocation9], 4
      %s1480 = int_to_ptr.vmem [resolvable:$true] %s1479
      %1485 = dma.vmem_to_hbm [thread:$0]  %s1480, 256, %s7, [#allocation5], 128, 128, 8
    $region45: #{tpu_custom_call.1} parent=1 // pred_fallthru
      _
    // Predicated region
    $region46: #{tpu_custom_call.1} parent=1 // pred_check
      _
    $region47: #{tpu_custom_call.1} parent=1 // pred_check_branch
      %1487 = sbr.rel (0) target = $region49
    $region48: #{tpu_custom_call.1} parent=1 // pred_region
      %1488 = dma.done [#allocation5], 256
    $region49: #{tpu_custom_call.1} parent=1 // pred_fallthru
      _
    %1489 = vsyncpa [#allocation5], 1
    %1490 = vsyncpa [#allocation6], 1
    %1491 = vsyncpa [#allocation8], 1

</llo_original>
